<compile_context>
chip_gen: v6e
topology: v6e:2x2x1
jax: 0.10.0
libtpu: 0.0.40
codegen_flags: <defaults>
</compile_context>

<pallas_src>
import jax
import jax.numpy as jnp
from jax.experimental import pallas as pl
from jax.experimental.pallas import tpu as pltpu


# ----------------------------------------------------------------------------
# helpers
# ----------------------------------------------------------------------------
def _round_up(n, m):
    return ((n + m - 1) // m) * m


def _silu(x):
    # explicit sigmoid spelling keeps lowering to exp/add/div only (safe on Mosaic);
    # inf intermediate for very negative x resolves to the correct limit (0).
    return x * (1.0 / (1.0 + jnp.exp(-x)))


def _softplus(x):
    return jnp.maximum(x, 0.0) + jnp.log(1.0 + jnp.exp(-jnp.abs(x)))


def _is_v5e_backend():
    try:
        kind = jax.devices()[0].device_kind.lower()
    except Exception:
        return False
    return ("v5 lite" in kind) or ("v5e" in kind) or ("v5lite" in kind)


def _im2col_patches_bf16(x_nhwc, kp, hw_pad, kh=3, kw=3, stride=2, pad=1):
    """One fused bf16 patches tensor: (B, hw_pad, kp).

    Columns [0, kh*kw*C) are the conv patches, column kh*kw*C is a "ones" lane
    (1.0 for real rows, 0.0 for padded rows) used to fold the stem BN shift into
    the matmul; remaining columns and padded rows are zero.
    """
    B, H, W, C = x_nhwc.shape
    xb = x_nhwc.astype(jnp.bfloat16)
    xp = jnp.pad(xb, ((0, 0), (pad, pad), (pad, pad), (0, 0)))
    Ho = (H + 2 * pad - kh) // stride + 1
    Wo = (W + 2 * pad - kw) // stride + 1
    cols = []
    for i in range(kh):
        for j in range(kw):
            cols.append(xp[:, i:i + stride * Ho:stride, j:j + stride * Wo:stride, :])
    patches = jnp.concatenate(cols, axis=-1).reshape(B, Ho * Wo, kh * kw * C)
    ones = jnp.ones((B, Ho * Wo, 1), jnp.bfloat16)
    patches = jnp.concatenate([patches, ones], axis=-1)          # (B, hw, kh*kw*C + 1)
    k_used = kh * kw * C + 1
    patches = jnp.pad(patches, ((0, 0), (0, hw_pad - Ho * Wo), (0, kp - k_used)))
    return patches, Ho, Wo


# ----------------------------------------------------------------------------
# Fused backbone + heads kernel
# ----------------------------------------------------------------------------
def _make_kernel(hw, tile_rows, n_tiles, ep_dtype):
    inv_hw = 1.0 / float(hw)
    last_partial = (hw % tile_rows) != 0          # static python bool

    def kernel(patches_ref,                        # (tile_rows, kp) bf16
               w_stem_ref,                         # (kp, cs) bf16, BN scale+shift folded
               w_head_ref, head_shift_ref,         # (cs, fp) bf16 (scale folded), (1, fp) ep
               w1_ref, b1_ref,                     # fp Linear 128->512
               w2_ref, b2_ref,                     # fp Linear 512->256 (BN1 folded in)
               wh1_ref, bh1_ref,                   # packed head hidden (BN2 folded in)
               wh2_ref, bh2_ref,                   # packed head outputs, lane-dense
               out_ref,                            # (1, OUTP) f32
               feat_acc):                          # (1, fp) f32 scratch (GAP running sum)
        t = pl.program_id(1)

        @pl.when(t == 0)
        def _init():
            feat_acc[...] = jnp.zeros_like(feat_acc)

        # stem 3x3/s2 conv as im2col matmul; BN fully folded -> epilogue is just SiLU.
        z = jnp.dot(patches_ref[...], w_stem_ref[...],
                    preferred_element_type=jnp.float32)
        z = _silu(z.astype(ep_dtype))                       # zero rows stay exactly zero
        # 1x1 head conv (BN scale folded); shift add + SiLU in ep_dtype.
        h = jnp.dot(z.astype(jnp.bfloat16), w_head_ref[...],
                    preferred_element_type=jnp.float32)
        h = _silu(h.astype(ep_dtype) + head_shift_ref[...])

        # streaming global-average-pool sum (f32 accumulation in VMEM scratch)
        if last_partial:
            @pl.when(t < n_tiles - 1)
            def _acc_full():
                feat_acc[...] += jnp.sum(h.astype(jnp.float32), axis=0, keepdims=True)

            @pl.when(t == n_tiles - 1)
            def _acc_partial():
                # only the final tile contains zero-padded rows; mask them out
                row = jax.lax.broadcasted_iota(jnp.int32, h.shape, 0)
                limit = hw - t * tile_rows
                hm = jnp.where(row < limit, h, jnp.zeros_like(h))
                feat_acc[...] += jnp.sum(hm.astype(jnp.float32), axis=0, keepdims=True)
        else:
            feat_acc[...] += jnp.sum(h.astype(jnp.float32), axis=0, keepdims=True)

        @pl.when(t == n_tiles - 1)
        def _finalize():
            feat = (feat_acc[...] * inv_hw).astype(jnp.bfloat16)     # GAP -> (1, fp)
            # feature_processor: Linear->ReLU->(BN folded into next) x2
            h1 = jnp.dot(feat, w1_ref[...],
                         preferred_element_type=jnp.float32) + b1_ref[...]
            h1 = jnp.maximum(h1, 0.0)
            h2 = jnp.dot(h1.astype(jnp.bfloat16), w2_ref[...],
                         preferred_element_type=jnp.float32) + b2_ref[...]
            h2 = jnp.maximum(h2, 0.0)
            # packed heads: one matmul for both hidden layers ...
            hc = jnp.dot(h2.astype(jnp.bfloat16), wh1_ref[...],
                         preferred_element_type=jnp.float32) + bh1_ref[...]
            hc = jnp.maximum(hc, 0.0)
            # ... one lane-dense matmul for both scalar outputs.
            raw = jnp.dot(hc.astype(jnp.bfloat16), wh2_ref[...],
                          preferred_element_type=jnp.float32) + bh2_ref[...]
            lane = jax.lax.broadcasted_iota(jnp.int32, raw.shape, 1)
            # lane 0 = age (identity), lane 1 = uncertainty (Softplus)
            out_ref[...] = jnp.where(lane == 1, _softplus(raw), raw)

    return kernel


# ----------------------------------------------------------------------------
# Parameter construction (deterministic, synthetic) + packing / BN folding
# ----------------------------------------------------------------------------
def _fold_bn(key, c, eps=1e-5):
    kg, kb, km, kv = jax.random.split(key, 4)
    gamma = 1.0 + 0.2 * jax.random.normal(kg, (1, c), jnp.float32)
    beta = 0.1 * jax.random.normal(kb, (1, c), jnp.float32)
    mean = 0.1 * jax.random.normal(km, (1, c), jnp.float32)
    var = jax.random.uniform(kv, (1, c), jnp.float32, 0.5, 1.5)
    scale = gamma / jnp.sqrt(var + eps)
    shift = beta - mean * scale
    return scale, shift


def _linear(key, fan_in, fan_out):
    kw, kb = jax.random.split(key)
    w = jax.random.normal(kw, (fan_in, fan_out), jnp.float32) / jnp.sqrt(float(fan_in))
    b = 0.01 * jax.random.normal(kb, (1, fan_out), jnp.float32)
    return w, b


def init_params(key, cin=3, c_stem=16, feature_dim=128):
    """Logical (unpadded, f32) parameters; dense weights stored (in, out)."""
    ks = jax.random.split(key, 12)
    w_stem = (jax.random.normal(ks[0], (3, 3, cin, c_stem), jnp.float32)
              / jnp.sqrt(9.0 * cin)).reshape(9 * cin, c_stem)
    stem_scale, stem_shift = _fold_bn(ks[1], c_stem)
    w_head = jax.random.normal(ks[2], (c_stem, feature_dim), jnp.float32) / jnp.sqrt(float(c_stem))
    head_scale, head_shift = _fold_bn(ks[3], feature_dim)
    w1, b1 = _linear(ks[4], feature_dim, 512)
    s1, t1 = _fold_bn(ks[5], 512)
    w2, b2 = _linear(ks[6], 512, 256)
    s2, t2 = _fold_bn(ks[7], 256)
    wa1, ba1 = _linear(ks[8], 256, 128)
    wa2, ba2 = _linear(ks[9], 128, 1)
    wu1, bu1 = _linear(ks[10], 256, 64)
    wu2, bu2 = _linear(ks[11], 64, 1)
    return dict(w_stem=w_stem, stem_scale=stem_scale, stem_shift=stem_shift,
                w_head=w_head, head_scale=head_scale, head_shift=head_shift,
                w1=w1, b1=b1, s1=s1, t1=t1, w2=w2, b2=b2, s2=s2, t2=t2,
                wa1=wa1, ba1=ba1, wa2=wa2, ba2=ba2,
                wu1=wu1, bu1=bu1, wu2=wu2, bu2=bu2)


def pack_params(p):
    """One-time host-side packing: (8,128)-aligned padding, BN folding, bf16 cast."""
    f32, bf16 = jnp.float32, jnp.bfloat16
    k, c_stem = p["w_stem"].shape                  # (27, 16)
    fdim = p["w_head"].shape[1]                    # 128
    kp = _round_up(k + 1, 32)                      # 27 + ones-lane -> 32
    cs = _round_up(c_stem, 32)                     # 16 -> 32 (was 128: wasted MXU pushes)
    fp = _round_up(fdim, 128)                      # 128

    # stem: fold BN scale into columns, BN shift into the ones-lane row.
    w_stem = jnp.zeros((kp, cs), f32)
    w_stem = w_stem.at[:k, :c_stem].set(p["w_stem"] * p["stem_scale"])
    w_stem = w_stem.at[k, :c_stem].set(p["stem_shift"][0])

    # 1x1 head conv: fold BN scale into columns; keep shift as a single bias add.
    w_head = jnp.zeros((cs, fp), f32).at[:c_stem, :fdim].set(p["w_head"] * p["head_scale"])
    head_shift = jnp.zeros((1, fp), f32).at[:, :fdim].set(p["head_shift"])

    # feature_processor: Linear1 as-is; fold BN1(512) into Linear2, BN2(256) into heads.
    w1 = jnp.zeros((fp, 512), f32).at[:fdim, :].set(p["w1"])
    b1 = p["b1"]
    w2 = p["w2"] * p["s1"].reshape(-1, 1)
    b2 = p["t1"] @ p["w2"] + p["b2"]

    # packed heads: hidden layers side-by-side, outputs in one lane-dense slab.
    ha, hu = p["wa1"].shape[1], p["wu1"].shape[1]          # 128, 64
    hcdim = _round_up(ha + hu, 128)                        # 256
    outp = 128
    d_in = p["wa1"].shape[0]                               # 256
    wh1 = (jnp.zeros((d_in, hcdim), f32)
           .at[:, :ha].set(p["wa1"])
           .at[:, ha:ha + hu].set(p["wu1"]))
    bh1 = (jnp.zeros((1, hcdim), f32)
           .at[:, :ha].set(p["ba1"])
           .at[:, ha:ha + hu].set(p["bu1"]))
    wh1f = wh1 * p["s2"].reshape(-1, 1)                    # fold BN2 scale
    bh1f = p["t2"] @ wh1 + bh1                             # fold BN2 shift
    wh2 = (jnp.zeros((hcdim, outp), f32)
           .at[:ha, 0].set(p["wa2"][:, 0])
           .at[ha:ha + hu, 1].set(p["wu2"][:, 0]))
    bh2 = (jnp.zeros((1, outp), f32)
           .at[0, 0].set(p["ba2"][0, 0])
           .at[0, 1].set(p["bu2"][0, 0]))

    return {
        "w_stem": w_stem.astype(bf16),
        "w_head": w_head.astype(bf16),
        "head_shift": head_shift,                  # f32; cast to epilogue dtype per-call
        "w1": w1.astype(bf16), "b1": b1,
        "w2": w2.astype(bf16), "b2": b2,
        "wh1": wh1f.astype(bf16), "bh1": bh1f,
        "wh2": wh2.astype(bf16), "bh2": bh2,
    }


_WNAMES = ("w_stem", "w_head", "head_shift", "w1", "b1",
           "w2", "b2", "wh1", "bh1", "wh2", "bh2")


# ----------------------------------------------------------------------------
# Forward pass
# ----------------------------------------------------------------------------
def bone_age_forward(x_nchw, pp):
    x = jnp.transpose(x_nchw, (0, 2, 3, 1))                 # NCHW -> NHWC
    B, H, W, _ = x.shape

    # per-chip tuning: v5e has no bf16 VALU/EUP and only 1 vst slot -> f32, smaller tiles
    is_v5e = _is_v5e_backend()
    ep_dtype = jnp.float32 if is_v5e else jnp.bfloat16
    max_tile = 1024 if is_v5e else 4096

    kp = pp["w_stem"].shape[0]
    cs = pp["w_stem"].shape[1]
    fp = pp["w_head"].shape[1]
    outp = pp["wh2"].shape[1]

    ho = (H + 2 - 3) // 2 + 1
    wo = (W + 2 - 3) // 2 + 1
    hw = ho * wo
    tile_rows = min(max_tile, _round_up(hw, 8))             # multiple of 8, no divisor cliff
    n_tiles = pl.cdiv(hw, tile_rows)
    hw_pad = n_tiles * tile_rows

    patches, _, _ = _im2col_patches_bf16(x, kp=kp, hw_pad=hw_pad)   # (B, hw_pad, kp) bf16

    weights = {n: pp[n] for n in _WNAMES}
    weights["head_shift"] = pp["head_shift"].astype(ep_dtype)
    args = [weights[n] for n in _WNAMES]

    in_specs = [pl.BlockSpec((None, tile_rows, kp), lambda b, t: (b, t, 0))]
    in_specs += [pl.BlockSpec(w.shape, lambda b, t: (0, 0)) for w in args]

    # VMEM budget: double-buffered patch tile + resident weights + intermediates.
    patch_bytes = 2 * tile_rows * kp * 2
    w_bytes = sum(2 * w.size * w.dtype.itemsize for w in args)
    ep_size = jnp.dtype(ep_dtype).itemsize
    act_bytes = tile_rows * (cs + fp) * (4 + 2 * ep_size)
    vmem_limit = int(min(56 << 20, max(32 << 20,
                                       patch_bytes + w_bytes + act_bytes + (8 << 20))))

    kernel = _make_kernel(hw=hw, tile_rows=tile_rows, n_tiles=n_tiles, ep_dtype=ep_dtype)

    out = pl.pallas_call(
        kernel,
        out_shape=jax.ShapeDtypeStruct((B, 1, outp), jnp.float32),
        grid_spec=pltpu.PrefetchScalarGridSpec(
            num_scalar_prefetch=0,
            grid=(B, n_tiles),
            in_specs=in_specs,
            out_specs=pl.BlockSpec((None, 1, outp), lambda b, t: (b, 0, 0)),
            scratch_shapes=[pltpu.VMEM((1, fp), jnp.float32)],
        ),
        compiler_params=pltpu.CompilerParams(
            dimension_semantics=("parallel", "arbitrary"),
            vmem_limit_bytes=vmem_limit,
        ),
    )(patches, *args)

    # matches PyTorch: {'age': age_pred.squeeze(), 'uncertainty': uncertainty.squeeze()}
    age = jnp.squeeze(out[:, 0, 0])
    unc = jnp.squeeze(out[:, 0, 1])
    return {"age": age, "uncertainty": unc}


if __name__ == "__main__":
    key = jax.random.PRNGKey(0)
    k_x, k_p = jax.random.split(key)
    # SMALL synthetic shapes consistent with the module's forward:
    # batch=2, 3-channel image, 32x32 spatial, backbone feature_dim=128 stand-in.
    x = jax.random.normal(k_x, (2, 3, 32, 32), jnp.float32)          # NCHW like PyTorch
    params = init_params(k_p, cin=3, c_stem=16, feature_dim=128)
    packed = pack_params(params)

    fwd = jax.jit(bone_age_forward)
    out = fwd(x, packed)
    jax.block_until_ready(out)
    assert out["age"].shape == (2,) and out["uncertainty"].shape == (2,)
    assert bool(jnp.all(jnp.isfinite(out["age"]))) and bool(jnp.all(out["uncertainty"] >= 0.0))
    print("KERNEL_OK")
</pallas_src>

<mosaic_0001>
module attributes {stable_mosaic.version = 11 : i64} {
  func.func @kernel(%arg0: i32, %arg1: i32, %arg2: memref<1x256x32xbf16, #tpu.memory_space<vmem>>, %arg3: memref<32x32xbf16, #tpu.memory_space<vmem>>, %arg4: memref<32x128xbf16, #tpu.memory_space<vmem>>, %arg5: memref<1x128xbf16, #tpu.memory_space<vmem>>, %arg6: memref<128x512xbf16, #tpu.memory_space<vmem>>, %arg7: memref<1x512xf32, #tpu.memory_space<vmem>>, %arg8: memref<512x256xbf16, #tpu.memory_space<vmem>>, %arg9: memref<1x256xf32, #tpu.memory_space<vmem>>, %arg10: memref<256x256xbf16, #tpu.memory_space<vmem>>, %arg11: memref<1x256xf32, #tpu.memory_space<vmem>>, %arg12: memref<256x128xbf16, #tpu.memory_space<vmem>>, %arg13: memref<1x128xf32, #tpu.memory_space<vmem>>, %arg14: memref<1x1x128xf32, #tpu.memory_space<vmem>>, %arg15: memref<1x128xf32, #tpu.memory_space<vmem>>) attributes {dimension_semantics = [#tpu.dimension_semantics<parallel>, #tpu.dimension_semantics<arbitrary>], iteration_bounds = array<i64: 2, 1>, scalar_prefetch = 0 : i64, scratch_operands = 1 : i64, tpu.core_type = #tpu.core_type<tc>, window_params = [{transform_indices = @transform_0, window_bounds = array<i64: 1, 256, 32>}, {pipeline_mode = #tpu.pipeline_mode<synchronous>, transform_indices = @transform_1, window_bounds = array<i64: 32, 32>}, {pipeline_mode = #tpu.pipeline_mode<synchronous>, transform_indices = @transform_2, window_bounds = array<i64: 32, 128>}, {pipeline_mode = #tpu.pipeline_mode<synchronous>, transform_indices = @transform_3, window_bounds = array<i64: 1, 128>}, {pipeline_mode = #tpu.pipeline_mode<synchronous>, transform_indices = @transform_4, window_bounds = array<i64: 128, 512>}, {pipeline_mode = #tpu.pipeline_mode<synchronous>, transform_indices = @transform_5, window_bounds = array<i64: 1, 512>}, {pipeline_mode = #tpu.pipeline_mode<synchronous>, transform_indices = @transform_6, window_bounds = array<i64: 512, 256>}, {pipeline_mode = #tpu.pipeline_mode<synchronous>, transform_indices = @transform_7, window_bounds = array<i64: 1, 256>}, {pipeline_mode = #tpu.pipeline_mode<synchronous>, transform_indices = @transform_8, window_bounds = array<i64: 256, 256>}, {pipeline_mode = #tpu.pipeline_mode<synchronous>, transform_indices = @transform_9, window_bounds = array<i64: 1, 256>}, {pipeline_mode = #tpu.pipeline_mode<synchronous>, transform_indices = @transform_10, window_bounds = array<i64: 256, 128>}, {pipeline_mode = #tpu.pipeline_mode<synchronous>, transform_indices = @transform_11, window_bounds = array<i64: 1, 128>}, {transform_indices = @transform_12, window_bounds = array<i64: 1, 1, 128>}]} {
    %c0_i32 = arith.constant 0 : i32
    %0 = arith.cmpi eq, %arg1, %c0_i32 : i32
    %1 = arith.extui %0 : i1 to i32
    %c0_i32_0 = arith.constant 0 : i32
    %2 = arith.cmpi ne, %1, %c0_i32_0 : i32
    scf.if %2 {
      %cst_23 = arith.constant 0.000000e+00 : f32
      %39 = vector.broadcast %cst_23 : f32 to vector<1x128xf32>
      %c0_24 = arith.constant 0 : index
      %c0_25 = arith.constant 0 : index
      %40 = vector.load %arg15[%c0_24, %c0_25] : memref<1x128xf32, #tpu.memory_space<vmem>>, vector<1x128xf32>
      tpu.vector_store %arg15[%c0_24, %c0_25], %39 {strides = array<i32>} : memref<1x128xf32, #tpu.memory_space<vmem>>, vector<1x128xf32>,
    } else {
    }
    %c0 = arith.constant 0 : index
    %c0_1 = arith.constant 0 : index
    %c0_2 = arith.constant 0 : index
    %3 = vector.load %arg2[%c0, %c0_1, %c0_2] : memref<1x256x32xbf16, #tpu.memory_space<vmem>>, vector<1x256x32xbf16>
    %4 = vector.shape_cast %3 : vector<1x256x32xbf16> to vector<256x32xbf16>
    %c0_3 = arith.constant 0 : index
    %c0_4 = arith.constant 0 : index
    %5 = vector.load %arg3[%c0_3, %c0_4] : memref<32x32xbf16, #tpu.memory_space<vmem>>, vector<32x32xbf16>
    %cst = arith.constant dense<0.000000e+00> : vector<256x32xf32>
    %6 = tpu.matmul %4, %5, %cst {dimension_numbers = #tpu.dot_dimension_numbers<[1], [0], [0], [1], [0, 0, 1, 1], [], []>} : vector<256x32xbf16>, vector<32x32xbf16>, vector<256x32xf32> -> vector<256x32xf32>
    %7 = arith.truncf %6 : vector<256x32xf32> to vector<256x32xbf16>
    %cst_5 = arith.constant 0.000000e+00 : bf16
    %8 = vector.broadcast %cst_5 : bf16 to vector<256x32xbf16>
    %9 = arith.subf %8, %7 : vector<256x32xbf16>
    %10 = math.exp %9 : vector<256x32xbf16>
    %cst_6 = arith.constant 1.000000e+00 : bf16
    %11 = vector.broadcast %cst_6 : bf16 to vector<256x32xbf16>
    %12 = arith.addf %11, %10 : vector<256x32xbf16>
    %cst_7 = arith.constant 1.000000e+00 : bf16
    %13 = vector.broadcast %cst_7 : bf16 to vector<256x32xbf16>
    %14 = arith.divf %13, %12 : vector<256x32xbf16>
    %15 = arith.mulf %7, %14 : vector<256x32xbf16>
    %c0_8 = arith.constant 0 : index
    %c0_9 = arith.constant 0 : index
    %16 = vector.load %arg4[%c0_8, %c0_9] : memref<32x128xbf16, #tpu.memory_space<vmem>>, vector<32x128xbf16>
    %cst_10 = arith.constant dense<0.000000e+00> : vector<256x128xf32>
    %17 = tpu.matmul %15, %16, %cst_10 {dimension_numbers = #tpu.dot_dimension_numbers<[1], [0], [0], [1], [0, 0, 1, 1], [], []>} : vector<256x32xbf16>, vector<32x128xbf16>, vector<256x128xf32> -> vector<256x128xf32>
    %18 = arith.truncf %17 : vector<256x128xf32> to vector<256x128xbf16>
    %c0_11 = arith.constant 0 : index
    %c0_12 = arith.constant 0 : index
    %19 = vector.load %arg5[%c0_11, %c0_12] : memref<1x128xbf16, #tpu.memory_space<vmem>>, vector<1x128xbf16>
    %20 = vector.broadcast %19 : vector<1x128xbf16> to vector<256x128xbf16>
    %21 = arith.addf %18, %20 : vector<256x128xbf16>
    %cst_13 = arith.constant 0.000000e+00 : bf16
    %22 = vector.broadcast %cst_13 : bf16 to vector<256x128xbf16>
    %23 = arith.subf %22, %21 : vector<256x128xbf16>
    %24 = math.exp %23 : vector<256x128xbf16>
    %cst_14 = arith.constant 1.000000e+00 : bf16
    %25 = vector.broadcast %cst_14 : bf16 to vector<256x128xbf16>
    %26 = arith.addf %25, %24 : vector<256x128xbf16>
    %cst_15 = arith.constant 1.000000e+00 : bf16
    %27 = vector.broadcast %cst_15 : bf16 to vector<256x128xbf16>
    %28 = arith.divf %27, %26 : vector<256x128xbf16>
    %29 = arith.mulf %21, %28 : vector<256x128xbf16>
    %c0_16 = arith.constant 0 : index
    %c0_17 = arith.constant 0 : index
    %30 = vector.load %arg15[%c0_16, %c0_17] : memref<1x128xf32, #tpu.memory_space<vmem>>, vector<1x128xf32>
    %31 = arith.extf %29 : vector<256x128xbf16> to vector<256x128xf32>
    %cst_18 = arith.constant dense<0.000000e+00> : vector<128xf32>
    %32 = vector.multi_reduction <add>, %31, %cst_18 [0] : vector<256x128xf32> to vector<128xf32>
    %33 = vector.shape_cast %32 : vector<128xf32> to vector<1x128xf32>
    %34 = arith.addf %30, %33 : vector<1x128xf32>
    %c0_19 = arith.constant 0 : index
    %c0_20 = arith.constant 0 : index
    %35 = vector.load %arg15[%c0_19, %c0_20] : memref<1x128xf32, #tpu.memory_space<vmem>>, vector<1x128xf32>
    tpu.vector_store %arg15[%c0_19, %c0_20], %34 {strides = array<i32>} : memref<1x128xf32, #tpu.memory_space<vmem>>, vector<1x128xf32>,
    %c0_i32_21 = arith.constant 0 : i32
    %36 = arith.cmpi eq, %arg1, %c0_i32_21 : i32
    %37 = arith.extui %36 : i1 to i32
    %c0_i32_22 = arith.constant 0 : i32
    %38 = arith.cmpi ne, %37, %c0_i32_22 : i32
    scf.if %38 {
      %c0_23 = arith.constant 0 : index
      %c0_24 = arith.constant 0 : index
      %39 = vector.load %arg15[%c0_23, %c0_24] : memref<1x128xf32, #tpu.memory_space<vmem>>, vector<1x128xf32>
      %cst_25 = arith.constant 3.906250e-03 : f32
      %40 = vector.broadcast %cst_25 : f32 to vector<1x128xf32>
      %41 = arith.mulf %39, %40 : vector<1x128xf32>
      %42 = arith.truncf %41 : vector<1x128xf32> to vector<1x128xbf16>
      %c0_26 = arith.constant 0 : index
      %c0_27 = arith.constant 0 : index
      %43 = vector.load %arg6[%c0_26, %c0_27] : memref<128x512xbf16, #tpu.memory_space<vmem>>, vector<128x512xbf16>
      %cst_28 = arith.constant dense<0.000000e+00> : vector<1x512xf32>
      %44 = tpu.matmul %42, %43, %cst_28 {dimension_numbers = #tpu.dot_dimension_numbers<[1], [0], [0], [1], [0, 0, 1, 1], [], []>} : vector<1x128xbf16>, vector<128x512xbf16>, vector<1x512xf32> -> vector<1x512xf32>
      %c0_29 = arith.constant 0 : index
      %c0_30 = arith.constant 0 : index
      %45 = vector.load %arg7[%c0_29, %c0_30] : memref<1x512xf32, #tpu.memory_space<vmem>>, vector<1x512xf32>
      %46 = arith.addf %44, %45 : vector<1x512xf32>
      %cst_31 = arith.constant 0.000000e+00 : f32
      %47 = vector.broadcast %cst_31 : f32 to vector<1x512xf32>
      %48 = arith.maximumf %46, %47 : vector<1x512xf32>
      %49 = arith.truncf %48 : vector<1x512xf32> to vector<1x512xbf16>
      %c0_32 = arith.constant 0 : index
      %c0_33 = arith.constant 0 : index
      %50 = vector.load %arg8[%c0_32, %c0_33] : memref<512x256xbf16, #tpu.memory_space<vmem>>, vector<512x256xbf16>
      %cst_34 = arith.constant dense<0.000000e+00> : vector<1x256xf32>
      %51 = tpu.matmul %49, %50, %cst_34 {dimension_numbers = #tpu.dot_dimension_numbers<[1], [0], [0], [1], [0, 0, 1, 1], [], []>} : vector<1x512xbf16>, vector<512x256xbf16>, vector<1x256xf32> -> vector<1x256xf32>
      %c0_35 = arith.constant 0 : index
      %c0_36 = arith.constant 0 : index
      %52 = vector.load %arg9[%c0_35, %c0_36] : memref<1x256xf32, #tpu.memory_space<vmem>>, vector<1x256xf32>
      %53 = arith.addf %51, %52 : vector<1x256xf32>
      %cst_37 = arith.constant 0.000000e+00 : f32
      %54 = vector.broadcast %cst_37 : f32 to vector<1x256xf32>
      %55 = arith.maximumf %53, %54 : vector<1x256xf32>
      %56 = arith.truncf %55 : vector<1x256xf32> to vector<1x256xbf16>
      %c0_38 = arith.constant 0 : index
      %c0_39 = arith.constant 0 : index
      %57 = vector.load %arg10[%c0_38, %c0_39] : memref<256x256xbf16, #tpu.memory_space<vmem>>, vector<256x256xbf16>
      %cst_40 = arith.constant dense<0.000000e+00> : vector<1x256xf32>
      %58 = tpu.matmul %56, %57, %cst_40 {dimension_numbers = #tpu.dot_dimension_numbers<[1], [0], [0], [1], [0, 0, 1, 1], [], []>} : vector<1x256xbf16>, vector<256x256xbf16>, vector<1x256xf32> -> vector<1x256xf32>
      %c0_41 = arith.constant 0 : index
      %c0_42 = arith.constant 0 : index
      %59 = vector.load %arg11[%c0_41, %c0_42] : memref<1x256xf32, #tpu.memory_space<vmem>>, vector<1x256xf32>
      %60 = arith.addf %58, %59 : vector<1x256xf32>
      %cst_43 = arith.constant 0.000000e+00 : f32
      %61 = vector.broadcast %cst_43 : f32 to vector<1x256xf32>
      %62 = arith.maximumf %60, %61 : vector<1x256xf32>
      %63 = arith.truncf %62 : vector<1x256xf32> to vector<1x256xbf16>
      %c0_44 = arith.constant 0 : index
      %c0_45 = arith.constant 0 : index
      %64 = vector.load %arg12[%c0_44, %c0_45] : memref<256x128xbf16, #tpu.memory_space<vmem>>, vector<256x128xbf16>
      %cst_46 = arith.constant dense<0.000000e+00> : vector<1x128xf32>
      %65 = tpu.matmul %63, %64, %cst_46 {dimension_numbers = #tpu.dot_dimension_numbers<[1], [0], [0], [1], [0, 0, 1, 1], [], []>} : vector<1x256xbf16>, vector<256x128xbf16>, vector<1x128xf32> -> vector<1x128xf32>
      %c0_47 = arith.constant 0 : index
      %c0_48 = arith.constant 0 : index
      %66 = vector.load %arg13[%c0_47, %c0_48] : memref<1x128xf32, #tpu.memory_space<vmem>>, vector<1x128xf32>
      %67 = arith.addf %65, %66 : vector<1x128xf32>
      %68 = tpu.iota {dimensions = array<i32: 1>} : vector<1x128xi32>
      %c1_i32 = arith.constant 1 : i32
      %69 = vector.broadcast %c1_i32 : i32 to vector<1x128xi32>
      %70 = arith.cmpi eq, %68, %69 : vector<1x128xi32>
      %cst_49 = arith.constant 0.000000e+00 : f32
      %71 = vector.broadcast %cst_49 : f32 to vector<1x128xf32>
      %72 = arith.maximumf %67, %71 : vector<1x128xf32>
      %73 = math.absf %67 : vector<1x128xf32>
      %cst_50 = arith.constant 0.000000e+00 : f32
      %74 = vector.broadcast %cst_50 : f32 to vector<1x128xf32>
      %75 = arith.subf %74, %73 : vector<1x128xf32>
      %76 = math.exp %75 : vector<1x128xf32>
      %cst_51 = arith.constant 1.000000e+00 : f32
      %77 = vector.broadcast %cst_51 : f32 to vector<1x128xf32>
      %78 = arith.addf %77, %76 : vector<1x128xf32>
      %79 = math.log %78 : vector<1x128xf32>
      %80 = arith.addf %72, %79 : vector<1x128xf32>
      %81 = arith.select %70, %80, %67 : vector<1x128xi1>, vector<1x128xf32>
      %c0_52 = arith.constant 0 : index
      %c0_53 = arith.constant 0 : index
      %c0_54 = arith.constant 0 : index
      %82 = vector.load %arg14[%c0_52, %c0_53, %c0_54] : memref<1x1x128xf32, #tpu.memory_space<vmem>>, vector<1x1x128xf32>
      %83 = vector.shape_cast %82 : vector<1x1x128xf32> to vector<1x128xf32>
      %84 = vector.shape_cast %81 : vector<1x128xf32> to vector<1x1x128xf32>
      tpu.vector_store %arg14[%c0_52, %c0_53, %c0_54], %84 {strides = array<i32>} : memref<1x1x128xf32, #tpu.memory_space<vmem>>, vector<1x1x128xf32>,
    } else {
    }
    return
  }
  func.func @transform_0(%arg0: i32, %arg1: i32) -> (i32, i32, i32) {
    %c0_i32 = arith.constant 0 : i32
    %c0_i32_0 = arith.constant 0 : i32
    return %arg0, %arg1, %c0_i32 : i32, i32, i32
  }
  func.func @transform_1(%arg0: i32, %arg1: i32) -> (i32, i32) {
    %c0_i32 = arith.constant 0 : i32
    %c0_i32_0 = arith.constant 0 : i32
    %c0_i32_1 = arith.constant 0 : i32
    return %c0_i32, %c0_i32_0 : i32, i32
  }
  func.func @transform_2(%arg0: i32, %arg1: i32) -> (i32, i32) {
    %c0_i32 = arith.constant 0 : i32
    %c0_i32_0 = arith.constant 0 : i32
    %c0_i32_1 = arith.constant 0 : i32
    return %c0_i32, %c0_i32_0 : i32, i32
  }
  func.func @transform_3(%arg0: i32, %arg1: i32) -> (i32, i32) {
    %c0_i32 = arith.constant 0 : i32
    %c0_i32_0 = arith.constant 0 : i32
    %c0_i32_1 = arith.constant 0 : i32
    return %c0_i32, %c0_i32_0 : i32, i32
  }
  func.func @transform_4(%arg0: i32, %arg1: i32) -> (i32, i32) {
    %c0_i32 = arith.constant 0 : i32
    %c0_i32_0 = arith.constant 0 : i32
    %c0_i32_1 = arith.constant 0 : i32
    return %c0_i32, %c0_i32_0 : i32, i32
  }
  func.func @transform_5(%arg0: i32, %arg1: i32) -> (i32, i32) {
    %c0_i32 = arith.constant 0 : i32
    %c0_i32_0 = arith.constant 0 : i32
    %c0_i32_1 = arith.constant 0 : i32
    return %c0_i32, %c0_i32_0 : i32, i32
  }
  func.func @transform_6(%arg0: i32, %arg1: i32) -> (i32, i32) {
    %c0_i32 = arith.constant 0 : i32
    %c0_i32_0 = arith.constant 0 : i32
    %c0_i32_1 = arith.constant 0 : i32
    return %c0_i32, %c0_i32_0 : i32, i32
  }
  func.func @transform_7(%arg0: i32, %arg1: i32) -> (i32, i32) {
    %c0_i32 = arith.constant 0 : i32
    %c0_i32_0 = arith.constant 0 : i32
    %c0_i32_1 = arith.constant 0 : i32
    return %c0_i32, %c0_i32_0 : i32, i32
  }
  func.func @transform_8(%arg0: i32, %arg1: i32) -> (i32, i32) {
    %c0_i32 = arith.constant 0 : i32
    %c0_i32_0 = arith.constant 0 : i32
    %c0_i32_1 = arith.constant 0 : i32
    return %c0_i32, %c0_i32_0 : i32, i32
  }
  func.func @transform_9(%arg0: i32, %arg1: i32) -> (i32, i32) {
    %c0_i32 = arith.constant 0 : i32
    %c0_i32_0 = arith.constant 0 : i32
    %c0_i32_1 = arith.constant 0 : i32
    return %c0_i32, %c0_i32_0 : i32, i32
  }
  func.func @transform_10(%arg0: i32, %arg1: i32) -> (i32, i32) {
    %c0_i32 = arith.constant 0 : i32
    %c0_i32_0 = arith.constant 0 : i32
    %c0_i32_1 = arith.constant 0 : i32
    return %c0_i32, %c0_i32_0 : i32, i32
  }
  func.func @transform_11(%arg0: i32, %arg1: i32) -> (i32, i32) {
    %c0_i32 = arith.constant 0 : i32
    %c0_i32_0 = arith.constant 0 : i32
    %c0_i32_1 = arith.constant 0 : i32
    return %c0_i32, %c0_i32_0 : i32, i32
  }
  func.func @transform_12(%arg0: i32, %arg1: i32) -> (i32, i32, i32) {
    %c0_i32 = arith.constant 0 : i32
    %c0_i32_0 = arith.constant 0 : i32
    %c0_i32_1 = arith.constant 0 : i32
    return %arg0, %c0_i32, %c0_i32_0 : i32, i32, i32
  }
}

</mosaic_0001>

<llo_original>
// kernel: bone_age_forward.1
$region0: #{bone_age_forward.1}
  #allocation0 [shape = 'u32[]', space=smem, size = 0x4, offset = 0x4, fixed_abs, tag = 'smem constant byte address 0x4 - core index']
  #allocation1 [shape = 'u32[144,128]{1,0:T(1,128)}', space=vmem, size = 0x12000, scoped, tag = 'internal scratch']
  #allocation2 [shape = 'f32[1,128]{1,0:T(1,128)}', space=vmem, size = 0x200, scoped, tag = 'scratch operand']
  %s0 = inlined_call_operand.vmem [shape: bf16[2,256,32], index: 0, kind: input, shape index: {}]
  %s1 = inlined_call_operand.vmem [shape: bf16[32,32], index: 1, kind: input, shape index: {}]
  %s2 = inlined_call_operand.vmem [shape: bf16[32,128], index: 2, kind: input, shape index: {}]
  %s3 = inlined_call_operand.vmem [shape: bf16[1,128], index: 3, kind: input, shape index: {}]
  %s4 = inlined_call_operand.vmem [shape: bf16[128,512], index: 4, kind: input, shape index: {}]
  %s5 = inlined_call_operand.vmem [shape: f32[1,512], index: 5, kind: input, shape index: {}]
  %s6 = inlined_call_operand.vmem [shape: bf16[512,256], index: 6, kind: input, shape index: {}]
  %s7 = inlined_call_operand.vmem [shape: f32[1,256], index: 7, kind: input, shape index: {}]
  %s8 = inlined_call_operand.vmem [shape: bf16[256,256], index: 8, kind: input, shape index: {}]
  %s9 = inlined_call_operand.vmem [shape: f32[1,256], index: 9, kind: input, shape index: {}]
  %s10 = inlined_call_operand.vmem [shape: bf16[256,128], index: 10, kind: input, shape index: {}]
  %s11 = inlined_call_operand.vmem [shape: f32[1,128], index: 11, kind: input, shape index: {}]
  %s12 = inlined_call_operand.vmem [shape: f32[2,1,128], index: 12, kind: output, shape index: {}]
  %s13 = sld [smem:[#allocation0]]
  $region89: #{bone_age_forward.1} parent=0
    _
  %s15 = ssub.s32 1, %s13
  %s16 = scalar_select 0, %s15, %s13
  loop: start=0, step=1, limit=4
  $region2: #{bone_age_forward.1} parent=0 // loop_pre_header
    _
  $region3: #{bone_age_forward.1} parent=0 // loop_header
    %s18 = sphi 0, %s22
    %p19 = scmp.ge.s32.totalorder %s18, 4
    %s25 = sphi 0, %s37
    %s26 = sphi 0, %s33
    %s27 = sphi 0, %s25
    %s28 = sphi 0, %s26
    %s29 = sphi 0, %s27
    %s30 = sphi 0, %s28
    %s42 = sphi 0, %s44
    %s45 = sphi 0, %s42
    %s46 = sphi 0, %s45
    %s62 = sphi 0, %s46
    %s66 = sphi 0, %s66
    %s68 = sphi 0, %s66
    %s69 = sphi 0, %s68
    %s83 = sphi 0, %s69
    %s87 = sphi 0, %s87
    %s89 = sphi 0, %s87
    %s90 = sphi 0, %s89
    %s104 = sphi 0, %s90
    %s108 = sphi 0, %s108
    %s110 = sphi 0, %s108
    %s111 = sphi 0, %s110
    %s125 = sphi 0, %s111
    %s129 = sphi 0, %s129
    %s131 = sphi 0, %s129
    %s132 = sphi 0, %s131
    %s146 = sphi 0, %s132
    %s150 = sphi 0, %s150
    %s152 = sphi 0, %s150
    %s153 = sphi 0, %s152
    %s167 = sphi 0, %s153
    %s171 = sphi 0, %s171
    %s173 = sphi 0, %s171
    %s174 = sphi 0, %s173
    %s188 = sphi 0, %s174
    %s192 = sphi 0, %s192
    %s194 = sphi 0, %s192
    %s195 = sphi 0, %s194
    %s209 = sphi 0, %s195
    %s213 = sphi 0, %s213
    %s215 = sphi 0, %s213
    %s216 = sphi 0, %s215
    %s230 = sphi 0, %s216
    %s234 = sphi 0, %s234
    %s236 = sphi 0, %s234
    %s237 = sphi 0, %s236
    %s251 = sphi 0, %s237
    %s255 = sphi 0, %s255
    %s257 = sphi 0, %s255
    %s258 = sphi 0, %s257
    %s272 = sphi 0, %s258
    %s276 = sphi 0, %s276
    %s278 = sphi 0, %s276
    %s279 = sphi 0, %s278
    %s293 = sphi 0, %s279
    %s299 = sphi 0, %s301
    %s302 = sphi 0, %s299
    %s303 = sphi 0, %s302
    %s319 = sphi 0, %s303
  $region4: #{bone_age_forward.1} parent=0 // loop_header_branch
    %21 = sbr.rel (%p19) target = $region8
  $region5: #{bone_age_forward.1} parent=0 // loop_body
    %s23 = ssub.s32 %s18, 1
    %s24 = ssub.s32 %s18, 2
    %s31 = sadd.s32 1, %s26
    %p32 = scmp.ge.s32.totalorder %s31, 1
    %s33 = scalar_select %p32, 0, %s31
    %s34 = sadd.s32 1, %s25
    %s35 = scalar_select %p32, %s34, %s25
    %p36 = scmp.ge.s32.totalorder %s35, 2
    %s37 = scalar_select %p36, 0, %s35
    %s38 = ssub.s32 %s25, %s37
    %s39 = ssub.s32 %s26, %s33
    %s40 = sor.u32 %s38, %s39
    %p41 = scmp.eq.s32.totalorder %s40, 0
    %s43 = sadd.s32 %s42, 1
    %s44 = scalar_select %p41, %s42, %s43
    %p47 = pneg %p41
    %p48 = scmp.eq.s32.totalorder %s18, 1
    %p49 = por %p47, %p48
    %p50 = scmp.ne.s32.totalorder %s42, %s45
    %p51 = scmp.eq.s32.totalorder %s18, 0
    %p52 = por %p50, %p51
    %p53 = scmp.ne.s32.totalorder %s42, %s45
    %p54 = scmp.eq.s32.totalorder %s23, 1
    %p55 = por %p53, %p54
    %p56 = scmp.ne.s32.totalorder %s45, %s46
    %p57 = scmp.eq.s32.totalorder %s23, 0
    %p58 = por %p56, %p57
    %p59 = scmp.ne.s32.totalorder %s45, %s46
    %p60 = scmp.eq.s32.totalorder %s24, 1
    %p61 = por %p59, %p60
    %p63 = scmp.ne.s32.totalorder %s46, %s62
    %p64 = scmp.eq.s32.totalorder %s24, 0
    %p65 = por %p63, %p64
    %s67 = sadd.s32 %s66, 1
    %p70 = scmp.eq.s32.totalorder %s18, 1
    %p71 = scmp.ne.s32.totalorder %s66, %s68
    %p72 = scmp.eq.s32.totalorder %s18, 0
    %p73 = por %p71, %p72
    %p74 = scmp.ne.s32.totalorder %s66, %s68
    %p75 = scmp.eq.s32.totalorder %s23, 1
    %p76 = por %p74, %p75
    %p77 = scmp.ne.s32.totalorder %s68, %s69
    %p78 = scmp.eq.s32.totalorder %s23, 0
    %p79 = por %p77, %p78
    %p80 = scmp.ne.s32.totalorder %s68, %s69
    %p81 = scmp.eq.s32.totalorder %s24, 1
    %p82 = por %p80, %p81
    %p84 = scmp.ne.s32.totalorder %s69, %s83
    %p85 = scmp.eq.s32.totalorder %s24, 0
    %p86 = por %p84, %p85
    %s88 = sadd.s32 %s87, 1
    %p91 = scmp.eq.s32.totalorder %s18, 1
    %p92 = scmp.ne.s32.totalorder %s87, %s89
    %p93 = scmp.eq.s32.totalorder %s18, 0
    %p94 = por %p92, %p93
    %p95 = scmp.ne.s32.totalorder %s87, %s89
    %p96 = scmp.eq.s32.totalorder %s23, 1
    %p97 = por %p95, %p96
    %p98 = scmp.ne.s32.totalorder %s89, %s90
    %p99 = scmp.eq.s32.totalorder %s23, 0
    %p100 = por %p98, %p99
    %p101 = scmp.ne.s32.totalorder %s89, %s90
    %p102 = scmp.eq.s32.totalorder %s24, 1
    %p103 = por %p101, %p102
    %p105 = scmp.ne.s32.totalorder %s90, %s104
    %p106 = scmp.eq.s32.totalorder %s24, 0
    %p107 = por %p105, %p106
    %s109 = sadd.s32 %s108, 1
    %p112 = scmp.eq.s32.totalorder %s18, 1
    %p113 = scmp.ne.s32.totalorder %s108, %s110
    %p114 = scmp.eq.s32.totalorder %s18, 0
    %p115 = por %p113, %p114
    %p116 = scmp.ne.s32.totalorder %s108, %s110
    %p117 = scmp.eq.s32.totalorder %s23, 1
    %p118 = por %p116, %p117
    %p119 = scmp.ne.s32.totalorder %s110, %s111
    %p120 = scmp.eq.s32.totalorder %s23, 0
    %p121 = por %p119, %p120
    %p122 = scmp.ne.s32.totalorder %s110, %s111
    %p123 = scmp.eq.s32.totalorder %s24, 1
    %p124 = por %p122, %p123
    %p126 = scmp.ne.s32.totalorder %s111, %s125
    %p127 = scmp.eq.s32.totalorder %s24, 0
    %p128 = por %p126, %p127
    %s130 = sadd.s32 %s129, 1
    %p133 = scmp.eq.s32.totalorder %s18, 1
    %p134 = scmp.ne.s32.totalorder %s129, %s131
    %p135 = scmp.eq.s32.totalorder %s18, 0
    %p136 = por %p134, %p135
    %p137 = scmp.ne.s32.totalorder %s129, %s131
    %p138 = scmp.eq.s32.totalorder %s23, 1
    %p139 = por %p137, %p138
    %p140 = scmp.ne.s32.totalorder %s131, %s132
    %p141 = scmp.eq.s32.totalorder %s23, 0
    %p142 = por %p140, %p141
    %p143 = scmp.ne.s32.totalorder %s131, %s132
    %p144 = scmp.eq.s32.totalorder %s24, 1
    %p145 = por %p143, %p144
    %p147 = scmp.ne.s32.totalorder %s132, %s146
    %p148 = scmp.eq.s32.totalorder %s24, 0
    %p149 = por %p147, %p148
    %s151 = sadd.s32 %s150, 1
    %p154 = scmp.eq.s32.totalorder %s18, 1
    %p155 = scmp.ne.s32.totalorder %s150, %s152
    %p156 = scmp.eq.s32.totalorder %s18, 0
    %p157 = por %p155, %p156
    %p158 = scmp.ne.s32.totalorder %s150, %s152
    %p159 = scmp.eq.s32.totalorder %s23, 1
    %p160 = por %p158, %p159
    %p161 = scmp.ne.s32.totalorder %s152, %s153
    %p162 = scmp.eq.s32.totalorder %s23, 0
    %p163 = por %p161, %p162
    %p164 = scmp.ne.s32.totalorder %s152, %s153
    %p165 = scmp.eq.s32.totalorder %s24, 1
    %p166 = por %p164, %p165
    %p168 = scmp.ne.s32.totalorder %s153, %s167
    %p169 = scmp.eq.s32.totalorder %s24, 0
    %p170 = por %p168, %p169
    %s172 = sadd.s32 %s171, 1
    %p175 = scmp.eq.s32.totalorder %s18, 1
    %p176 = scmp.ne.s32.totalorder %s171, %s173
    %p177 = scmp.eq.s32.totalorder %s18, 0
    %p178 = por %p176, %p177
    %p179 = scmp.ne.s32.totalorder %s171, %s173
    %p180 = scmp.eq.s32.totalorder %s23, 1
    %p181 = por %p179, %p180
    %p182 = scmp.ne.s32.totalorder %s173, %s174
    %p183 = scmp.eq.s32.totalorder %s23, 0
    %p184 = por %p182, %p183
    %p185 = scmp.ne.s32.totalorder %s173, %s174
    %p186 = scmp.eq.s32.totalorder %s24, 1
    %p187 = por %p185, %p186
    %p189 = scmp.ne.s32.totalorder %s174, %s188
    %p190 = scmp.eq.s32.totalorder %s24, 0
    %p191 = por %p189, %p190
    %s193 = sadd.s32 %s192, 1
    %p196 = scmp.eq.s32.totalorder %s18, 1
    %p197 = scmp.ne.s32.totalorder %s192, %s194
    %p198 = scmp.eq.s32.totalorder %s18, 0
    %p199 = por %p197, %p198
    %p200 = scmp.ne.s32.totalorder %s192, %s194
    %p201 = scmp.eq.s32.totalorder %s23, 1
    %p202 = por %p200, %p201
    %p203 = scmp.ne.s32.totalorder %s194, %s195
    %p204 = scmp.eq.s32.totalorder %s23, 0
    %p205 = por %p203, %p204
    %p206 = scmp.ne.s32.totalorder %s194, %s195
    %p207 = scmp.eq.s32.totalorder %s24, 1
    %p208 = por %p206, %p207
    %p210 = scmp.ne.s32.totalorder %s195, %s209
    %p211 = scmp.eq.s32.totalorder %s24, 0
    %p212 = por %p210, %p211
    %s214 = sadd.s32 %s213, 1
    %p217 = scmp.eq.s32.totalorder %s18, 1
    %p218 = scmp.ne.s32.totalorder %s213, %s215
    %p219 = scmp.eq.s32.totalorder %s18, 0
    %p220 = por %p218, %p219
    %p221 = scmp.ne.s32.totalorder %s213, %s215
    %p222 = scmp.eq.s32.totalorder %s23, 1
    %p223 = por %p221, %p222
    %p224 = scmp.ne.s32.totalorder %s215, %s216
    %p225 = scmp.eq.s32.totalorder %s23, 0
    %p226 = por %p224, %p225
    %p227 = scmp.ne.s32.totalorder %s215, %s216
    %p228 = scmp.eq.s32.totalorder %s24, 1
    %p229 = por %p227, %p228
    %p231 = scmp.ne.s32.totalorder %s216, %s230
    %p232 = scmp.eq.s32.totalorder %s24, 0
    %p233 = por %p231, %p232
    %s235 = sadd.s32 %s234, 1
    %p238 = scmp.eq.s32.totalorder %s18, 1
    %p239 = scmp.ne.s32.totalorder %s234, %s236
    %p240 = scmp.eq.s32.totalorder %s18, 0
    %p241 = por %p239, %p240
    %p242 = scmp.ne.s32.totalorder %s234, %s236
    %p243 = scmp.eq.s32.totalorder %s23, 1
    %p244 = por %p242, %p243
    %p245 = scmp.ne.s32.totalorder %s236, %s237
    %p246 = scmp.eq.s32.totalorder %s23, 0
    %p247 = por %p245, %p246
    %p248 = scmp.ne.s32.totalorder %s236, %s237
    %p249 = scmp.eq.s32.totalorder %s24, 1
    %p250 = por %p248, %p249
    %p252 = scmp.ne.s32.totalorder %s237, %s251
    %p253 = scmp.eq.s32.totalorder %s24, 0
    %p254 = por %p252, %p253
    %s256 = sadd.s32 %s255, 1
    %p259 = scmp.eq.s32.totalorder %s18, 1
    %p260 = scmp.ne.s32.totalorder %s255, %s257
    %p261 = scmp.eq.s32.totalorder %s18, 0
    %p262 = por %p260, %p261
    %p263 = scmp.ne.s32.totalorder %s255, %s257
    %p264 = scmp.eq.s32.totalorder %s23, 1
    %p265 = por %p263, %p264
    %p266 = scmp.ne.s32.totalorder %s257, %s258
    %p267 = scmp.eq.s32.totalorder %s23, 0
    %p268 = por %p266, %p267
    %p269 = scmp.ne.s32.totalorder %s257, %s258
    %p270 = scmp.eq.s32.totalorder %s24, 1
    %p271 = por %p269, %p270
    %p273 = scmp.ne.s32.totalorder %s258, %s272
    %p274 = scmp.eq.s32.totalorder %s24, 0
    %p275 = por %p273, %p274
    %s277 = sadd.s32 %s276, 1
    %p280 = scmp.eq.s32.totalorder %s18, 1
    %p281 = scmp.ne.s32.totalorder %s276, %s278
    %p282 = scmp.eq.s32.totalorder %s18, 0
    %p283 = por %p281, %p282
    %p284 = scmp.ne.s32.totalorder %s276, %s278
    %p285 = scmp.eq.s32.totalorder %s23, 1
    %p286 = por %p284, %p285
    %p287 = scmp.ne.s32.totalorder %s278, %s279
    %p288 = scmp.eq.s32.totalorder %s23, 0
    %p289 = por %p287, %p288
    %p290 = scmp.ne.s32.totalorder %s278, %s279
    %p291 = scmp.eq.s32.totalorder %s24, 1
    %p292 = por %p290, %p291
    %p294 = scmp.ne.s32.totalorder %s279, %s293
    %p295 = scmp.eq.s32.totalorder %s24, 0
    %p296 = por %p294, %p295
    %s297 = ssub.s32 %s25, %s37
    %p298 = scmp.eq.s32.totalorder %s297, 0
    %s300 = sadd.s32 %s299, 1
    %s301 = scalar_select %p298, %s299, %s300
    %p304 = pneg %p298
    %p305 = scmp.eq.s32.totalorder %s18, 1
    %p306 = por %p304, %p305
    %p307 = scmp.ne.s32.totalorder %s299, %s302
    %p308 = scmp.eq.s32.totalorder %s18, 0
    %p309 = por %p307, %p308
    %p310 = scmp.ne.s32.totalorder %s299, %s302
    %p311 = scmp.eq.s32.totalorder %s23, 1
    %p312 = por %p310, %p311
    %p313 = scmp.ne.s32.totalorder %s302, %s303
    %p314 = scmp.eq.s32.totalorder %s23, 0
    %p315 = por %p313, %p314
    %p316 = scmp.ne.s32.totalorder %s302, %s303
    %p317 = scmp.eq.s32.totalorder %s24, 1
    %p318 = por %p316, %p317
    %p320 = scmp.ne.s32.totalorder %s303, %s319
    %p321 = scmp.eq.s32.totalorder %s24, 0
    %p322 = por %p320, %p321
    %p323 = scmp.le.s32.totalorder 1, %s18
    %p324 = scmp.lt.s32.totalorder %s18, 3
    %p325 = pnand %p323, %p324
    %p326 = pneg %p325
    // Predicated region
    $region9: #{bone_age_forward.1} parent=5 // pred_check
      _
    $region10: #{bone_age_forward.1} parent=5 // pred_check_branch
      %328 = sbr.rel (%p325) target = $region12
    $region11: #{bone_age_forward.1} parent=5 // pred_region
      %s329 = ssub.s32 %s18, 1
      // Predicated region
      $region13: #{bone_age_forward.1} parent=11 // pred_check
        %p330 = pneg %p79
      $region14: #{bone_age_forward.1} parent=11 // pred_check_branch
        %332 = sbr.rel (%p330) target = $region16
      $region15: #{bone_age_forward.1} parent=11 // pred_region
        _
      $region16: #{bone_age_forward.1} parent=11 // pred_fallthru
        _
      // Predicated region
      $region17: #{bone_age_forward.1} parent=11 // pred_check
        %p333 = pneg %p100
      $region18: #{bone_age_forward.1} parent=11 // pred_check_branch
        %335 = sbr.rel (%p333) target = $region20
      $region19: #{bone_age_forward.1} parent=11 // pred_region
        _
      $region20: #{bone_age_forward.1} parent=11 // pred_fallthru
        _
      // Predicated region
      $region21: #{bone_age_forward.1} parent=11 // pred_check
        %p336 = pneg %p121
      $region22: #{bone_age_forward.1} parent=11 // pred_check_branch
        %338 = sbr.rel (%p336) target = $region24
      $region23: #{bone_age_forward.1} parent=11 // pred_region
        _
      $region24: #{bone_age_forward.1} parent=11 // pred_fallthru
        _
      // Predicated region
      $region25: #{bone_age_forward.1} parent=11 // pred_check
        %p339 = pneg %p142
      $region26: #{bone_age_forward.1} parent=11 // pred_check_branch
        %341 = sbr.rel (%p339) target = $region28
      $region27: #{bone_age_forward.1} parent=11 // pred_region
        _
      $region28: #{bone_age_forward.1} parent=11 // pred_fallthru
        _
      // Predicated region
      $region29: #{bone_age_forward.1} parent=11 // pred_check
        %p342 = pneg %p163
      $region30: #{bone_age_forward.1} parent=11 // pred_check_branch
        %344 = sbr.rel (%p342) target = $region32
      $region31: #{bone_age_forward.1} parent=11 // pred_region
        _
      $region32: #{bone_age_forward.1} parent=11 // pred_fallthru
        _
      // Predicated region
      $region33: #{bone_age_forward.1} parent=11 // pred_check
        %p345 = pneg %p184
      $region34: #{bone_age_forward.1} parent=11 // pred_check_branch
        %347 = sbr.rel (%p345) target = $region36
      $region35: #{bone_age_forward.1} parent=11 // pred_region
        _
      $region36: #{bone_age_forward.1} parent=11 // pred_fallthru
        _
      // Predicated region
      $region37: #{bone_age_forward.1} parent=11 // pred_check
        %p348 = pneg %p205
      $region38: #{bone_age_forward.1} parent=11 // pred_check_branch
        %350 = sbr.rel (%p348) target = $region40
      $region39: #{bone_age_forward.1} parent=11 // pred_region
        _
      $region40: #{bone_age_forward.1} parent=11 // pred_fallthru
        _
      // Predicated region
      $region41: #{bone_age_forward.1} parent=11 // pred_check
        %p351 = pneg %p226
      $region42: #{bone_age_forward.1} parent=11 // pred_check_branch
        %353 = sbr.rel (%p351) target = $region44
      $region43: #{bone_age_forward.1} parent=11 // pred_region
        _
      $region44: #{bone_age_forward.1} parent=11 // pred_fallthru
        _
      // Predicated region
      $region45: #{bone_age_forward.1} parent=11 // pred_check
        %p354 = pneg %p247
      $region46: #{bone_age_forward.1} parent=11 // pred_check_branch
        %356 = sbr.rel (%p354) target = $region48
      $region47: #{bone_age_forward.1} parent=11 // pred_region
        _
      $region48: #{bone_age_forward.1} parent=11 // pred_fallthru
        _
      // Predicated region
      $region49: #{bone_age_forward.1} parent=11 // pred_check
        %p357 = pneg %p268
      $region50: #{bone_age_forward.1} parent=11 // pred_check_branch
        %359 = sbr.rel (%p357) target = $region52
      $region51: #{bone_age_forward.1} parent=11 // pred_region
        _
      $region52: #{bone_age_forward.1} parent=11 // pred_fallthru
        _
      // Predicated region
      $region53: #{bone_age_forward.1} parent=11 // pred_check
        %p360 = pneg %p289
      $region54: #{bone_age_forward.1} parent=11 // pred_check_branch
        %362 = sbr.rel (%p360) target = $region56
      $region55: #{bone_age_forward.1} parent=11 // pred_region
        _
      $region56: #{bone_age_forward.1} parent=11 // pred_fallthru
        _
    $region12: #{bone_age_forward.1} parent=5 // pred_fallthru
      _
    %p363 = scmp.lt.s32.totalorder %s18, 2
    // Predicated region
    $region57: #{bone_age_forward.1} parent=5 // pred_check
      %p364 = pneg %p363
    $region58: #{bone_age_forward.1} parent=5 // pred_check_branch
      %366 = sbr.rel (%p364) target = $region60
    $region59: #{bone_age_forward.1} parent=5 // pred_region
      // Predicated region
      $region61: #{bone_age_forward.1} parent=59 // pred_check
        %p367 = pneg %p52
      $region62: #{bone_age_forward.1} parent=59 // pred_check_branch
        %369 = sbr.rel (%p367) target = $region64
      $region63: #{bone_age_forward.1} parent=59 // pred_region
        %s370 = smul.u32 32, %s26
        %p371 = scmp.lt.s32.totalorder %s25, 1
        %s372 = scalar_select %p371, %s25, 1
        %p373 = scmp.lt.s32.totalorder %s370, 31
        %s374 = scalar_select %p373, %s370, 31
        %s375 = smul.addr %s372, 32
        %s376 = sadd.s32 %s374, %s375
        %s377 = smul.addr %s376, 4
        %s378 = scalar_lea.vmem %s0, %s377
        %s379 = smul.u32 32, %s26
      $region64: #{bone_age_forward.1} parent=59 // pred_fallthru
        _
    $region60: #{bone_age_forward.1} parent=5 // pred_fallthru
      _
    %p380 = scmp.le.s32.totalorder 1, %s18
    %p381 = scmp.lt.s32.totalorder %s18, 3
    %p382 = pnand %p380, %p381
    %p383 = pneg %p382
    // Predicated region
    $region65: #{bone_age_forward.1} parent=5 // pred_check
      _
    $region66: #{bone_age_forward.1} parent=5 // pred_check_branch
      %385 = sbr.rel (%p382) target = $region68
    $region67: #{bone_age_forward.1} parent=5 // pred_region
      %s386 = ssub.s32 %s18, 1
      %s387 = smul.u32 32, %s28
      %p388 = scmp.lt.s32.totalorder %s27, 1
      %s389 = scalar_select %p388, %s27, 1
      %p390 = scmp.lt.s32.totalorder %s387, 31
      %s391 = scalar_select %p390, %s387, 31
      %s392 = smul.addr %s389, 32
      %s393 = sadd.s32 %s391, %s392
      %s394 = smul.addr %s393, 4
      %s395 = scalar_lea.vmem %s0, %s394
      %p396 = pneg %p58
      %p397 = pneg %p55
      %p398 = pneg %p79
      %p399 = pneg %p76
      %p400 = pneg %p100
      %p401 = pneg %p97
      %p402 = pneg %p121
      %p403 = pneg %p118
      %p404 = pneg %p142
      %p405 = pneg %p139
      %p406 = pneg %p163
      %p407 = pneg %p160
      %p408 = pneg %p184
      %p409 = pneg %p181
      %p410 = pneg %p205
      %p411 = pneg %p202
      %p412 = pneg %p226
      %p413 = pneg %p223
      %p414 = pneg %p247
      %p415 = pneg %p244
      %p416 = pneg %p268
      %p417 = pneg %p265
      %p418 = pneg %p289
      %p419 = pneg %p286
      %p420 = pneg %p315
      %p421 = pneg %p312
      %p422 = scmp.lt.s32.totalorder %s27, 1
      %s423 = scalar_select %p422, %s27, 1
      %s424 = scalar_lea.vmem %s12, %s423
      %s425 = smul.u32 32, %s28
      %p426 = scmp.lt.s32.totalorder %s27, 1
      %s427 = scalar_select %p426, %s27, 1
      %p428 = scmp.lt.s32.totalorder %s425, 31
      %s429 = scalar_select %p428, %s425, 31
      %s430 = smul.addr %s427, 32
      %s431 = sadd.s32 %s429, %s430
      %s432 = smul.addr %s431, 4
      %s433 = scalar_lea.vmem %s0, %s432
      %s434 = smul.u32 32, %s28
      %p435 = scmp.lt.s32.totalorder %s27, 1
      %s436 = scalar_select %p435, %s27, 1
      %s437 = scalar_lea.vmem %s12, %s436
      %p440 = scmp.eq.s32.totalorder %s28, 0
      // Predicated region
      $region69: #{bone_age_forward.1} parent=67 // pred_check
        %p441 = pneg %p440
      $region70: #{bone_age_forward.1} parent=67 // pred_check_branch
        %443 = sbr.rel (%p441) target = $region72
      $region71: #{bone_age_forward.1} parent=67 // pred_region
        %444 = vst [vmem:[#allocation2] sm:$0x1] 0.0
      $region72: #{bone_age_forward.1} parent=67 // pred_fallthru
        _
      %v445 = vld [vmem:[%s433] sm:$0xf]
      %v446 = vld [vmem:[%s433 + $0x4] sm:$0xf]
      %v447 = vld [vmem:[%s433 + $0x8] sm:$0xf]
      %v448 = vld [vmem:[%s433 + $0xc] sm:$0xf]
      %v449 = vld [vmem:[%s433 + $0x10] sm:$0xf]
      %v450 = vld [vmem:[%s433 + $0x14] sm:$0xf]
      %v451 = vld [vmem:[%s433 + $0x18] sm:$0xf]
      %v452 = vld [vmem:[%s433 + $0x1c] sm:$0xf]
      %v453 = vld [vmem:[%s433 + $0x20] sm:$0xf]
      %v454 = vld [vmem:[%s433 + $0x24] sm:$0xf]
      %v455 = vld [vmem:[%s433 + $0x28] sm:$0xf]
      %v456 = vld [vmem:[%s433 + $0x2c] sm:$0xf]
      %v457 = vld [vmem:[%s433 + $0x30] sm:$0xf]
      %v458 = vld [vmem:[%s433 + $0x34] sm:$0xf]
      %v459 = vld [vmem:[%s433 + $0x38] sm:$0xf]
      %v460 = vld [vmem:[%s433 + $0x3c] sm:$0xf]
      %v461 = vld [vmem:[%s433 + $0x40] sm:$0xf]
      %v462 = vld [vmem:[%s433 + $0x44] sm:$0xf]
      %v463 = vld [vmem:[%s433 + $0x48] sm:$0xf]
      %v464 = vld [vmem:[%s433 + $0x4c] sm:$0xf]
      %v465 = vld [vmem:[%s433 + $0x50] sm:$0xf]
      %v466 = vld [vmem:[%s433 + $0x54] sm:$0xf]
      %v467 = vld [vmem:[%s433 + $0x58] sm:$0xf]
      %v468 = vld [vmem:[%s433 + $0x5c] sm:$0xf]
      %v469 = vld [vmem:[%s433 + $0x60] sm:$0xf]
      %v470 = vld [vmem:[%s433 + $0x64] sm:$0xf]
      %v471 = vld [vmem:[%s433 + $0x68] sm:$0xf]
      %v472 = vld [vmem:[%s433 + $0x6c] sm:$0xf]
      %v473 = vld [vmem:[%s433 + $0x70] sm:$0xf]
      %v474 = vld [vmem:[%s433 + $0x74] sm:$0xf]
      %v475 = vld [vmem:[%s433 + $0x78] sm:$0xf]
      %v476 = vld [vmem:[%s433 + $0x7c] sm:$0xf]
      %v477 = vld [vmem:[%s1] sm:$0xf]
      %v478 = vld [vmem:[%s1 + $0x4] sm:$0xf]
      %v479 = vld [vmem:[%s1 + $0x8] sm:$0xf]
      %v480 = vld [vmem:[%s1 + $0xc] sm:$0xf]
      %v513 = vunpack.c.l.b16 %v445
      %v514 = vunpack.c.l.b16 %v446
      %v515 = vunpack.c.l.b16 %v447
      %v516 = vunpack.c.l.b16 %v448
      %v517 = vunpack.c.l.b16 %v449
      %v518 = vunpack.c.l.b16 %v450
      %v519 = vunpack.c.l.b16 %v451
      %v520 = vunpack.c.l.b16 %v452
      %v521 = vunpack.c.l.b16 %v453
      %v522 = vunpack.c.l.b16 %v454
      %v523 = vunpack.c.l.b16 %v455
      %v524 = vunpack.c.l.b16 %v456
      %v525 = vunpack.c.l.b16 %v457
      %v526 = vunpack.c.l.b16 %v458
      %v527 = vunpack.c.l.b16 %v459
      %v528 = vunpack.c.l.b16 %v460
      %v529 = vunpack.c.l.b16 %v461
      %v530 = vunpack.c.l.b16 %v462
      %v531 = vunpack.c.l.b16 %v463
      %v532 = vunpack.c.l.b16 %v464
      %v533 = vunpack.c.l.b16 %v465
      %v534 = vunpack.c.l.b16 %v466
      %v535 = vunpack.c.l.b16 %v467
      %v536 = vunpack.c.l.b16 %v468
      %v537 = vunpack.c.l.b16 %v469
      %v538 = vunpack.c.l.b16 %v470
      %v539 = vunpack.c.l.b16 %v471
      %v540 = vunpack.c.l.b16 %v472
      %v541 = vunpack.c.l.b16 %v473
      %v542 = vunpack.c.l.b16 %v474
      %v543 = vunpack.c.l.b16 %v475
      %v544 = vunpack.c.l.b16 %v476
      %v545 = vpack.c.b16 %v514, %v513
      %v546 = vpack.c.b16 %v516, %v515
      %v547 = vpack.c.b16 %v518, %v517
      %v548 = vpack.c.b16 %v520, %v519
      %v549 = vpack.c.b16 %v522, %v521
      %v550 = vpack.c.b16 %v524, %v523
      %v551 = vpack.c.b16 %v526, %v525
      %v552 = vpack.c.b16 %v528, %v527
      %v553 = vpack.c.b16 %v530, %v529
      %v554 = vpack.c.b16 %v532, %v531
      %v555 = vpack.c.b16 %v534, %v533
      %v556 = vpack.c.b16 %v536, %v535
      %v557 = vpack.c.b16 %v538, %v537
      %v558 = vpack.c.b16 %v540, %v539
      %v559 = vpack.c.b16 %v542, %v541
      %v560 = vpack.c.b16 %v544, %v543
      %v565 = vunpack.c.l.b16 %v477
      %v566 = vunpack.c.l.b16 %v478
      %v567 = vunpack.c.l.b16 %v479
      %v568 = vunpack.c.l.b16 %v480
      %v569 = vpack.c.b16 %v566, %v565
      %v570 = vpack.c.b16 %v568, %v567
      %vm573 = vcmask 261120
      %v575 = vsel %vm573, %v545, 0
      %v578 = vsel %vm573, %v546, 0
      %v581 = vsel %vm573, %v547, 0
      %v584 = vsel %vm573, %v548, 0
      %v587 = vsel %vm573, %v549, 0
      %v590 = vsel %vm573, %v550, 0
      %v593 = vsel %vm573, %v551, 0
      %v596 = vsel %vm573, %v552, 0
      %v599 = vsel %vm573, %v553, 0
      %v602 = vsel %vm573, %v554, 0
      %v605 = vsel %vm573, %v555, 0
      %v608 = vsel %vm573, %v556, 0
      %v611 = vsel %vm573, %v557, 0
      %v614 = vsel %vm573, %v558, 0
      %v617 = vsel %vm573, %v559, 0
      %v620 = vsel %vm573, %v560, 0
      %622 = vmatprep.subr.bf16.mxu0 0
      %623 = vmatpush1.bf16.msra.mxu0 0
      %624 = vmatprep.subr.bf16.mxu0 0
      %625 = vmatpush1.bf16.msra.mxu0 0
      %626 = vmatprep.subr.bf16.mxu0 0
      %627 = vmatpush1.bf16.msra.mxu0 0
      %628 = vmatprep.subr.bf16.mxu0 0
      %629 = vmatpush1.bf16.msra.mxu0 0
      %630 = vmatprep.subr.bf16.mxu0 0
      %631 = vmatpush1.bf16.msra.mxu0 0
      %632 = vmatprep.subr.bf16.mxu0 0
      %633 = vmatpush1.bf16.msra.mxu0 0
      %634 = vmatprep.subr.bf16.mxu0 0
      %635 = vmatpush1.bf16.msra.mxu0 %v570
      %636 = vmatprep.subr.bf16.mxu0 0
      %637 = vmatpush1.bf16.msra.mxu0 %v569
      %638 = vmatprep.subr.bf16.mxu0 0
      %639 = vmatpush2.bf16.msra.mxu0 0
      %640 = vmatprep.subr.bf16.mxu0 0
      %641 = vmatpush2.bf16.msra.mxu0 0
      %642 = vmatprep.subr.bf16.mxu0 0
      %643 = vmatpush2.bf16.msra.mxu0 0
      %644 = vmatprep.subr.bf16.mxu0 0
      %645 = vmatpush2.bf16.msra.mxu0 0
      %646 = vmatprep.subr.bf16.mxu0 0
      %647 = vmatpush2.bf16.msra.mxu0 0
      %648 = vmatprep.subr.bf16.mxu0 0
      %649 = vmatpush2.bf16.msra.mxu0 0
      %650 = vmatprep.subr.bf16.mxu0 0
      %651 = vmatpush2.bf16.msra.mxu0 0
      %652 = vmatprep.subr.bf16.mxu0 0
      %653 = vmatpush2.bf16.msra.mxu0 0
      %654 = vmatprep.mubr.bf16.mxu0 0
      %655 = vmatmul.mubr.bf16.gmra.mxu0 %v575
      %v656 = vpop.f32.mrf.mxu0
      %v657 = vadd.f32 0.0, %v656
      %v658 = vpop.f32.mrf.mxu0
      %v659 = vpop.f32.mrf.mxu0
      %v660 = vadd.f32 0.0, %v659
      %v661 = vpop.f32.mrf.mxu0
      %662 = vmatprep.mubr.bf16.mxu0 0
      %663 = vmatmul.mubr.bf16.gmra.mxu0 %v578
      %v664 = vpop.f32.mrf.mxu0
      %v665 = vadd.f32 0.0, %v664
      %v666 = vpop.f32.mrf.mxu0
      %v667 = vpop.f32.mrf.mxu0
      %v668 = vadd.f32 0.0, %v667
      %v669 = vpop.f32.mrf.mxu0
      %670 = vmatprep.mubr.bf16.mxu0 0
      %671 = vmatmul.mubr.bf16.gmra.mxu0 %v581
      %v672 = vpop.f32.mrf.mxu0
      %v673 = vadd.f32 0.0, %v672
      %v674 = vpop.f32.mrf.mxu0
      %v675 = vpop.f32.mrf.mxu0
      %v676 = vadd.f32 0.0, %v675
      %v677 = vpop.f32.mrf.mxu0
      %678 = vmatprep.mubr.bf16.mxu0 0
      %679 = vmatmul.mubr.bf16.gmra.mxu0 %v584
      %v680 = vpop.f32.mrf.mxu0
      %v681 = vadd.f32 0.0, %v680
      %v682 = vpop.f32.mrf.mxu0
      %v683 = vpop.f32.mrf.mxu0
      %v684 = vadd.f32 0.0, %v683
      %v685 = vpop.f32.mrf.mxu0
      %686 = vmatprep.mubr.bf16.mxu0 0
      %687 = vmatmul.mubr.bf16.gmra.mxu0 %v587
      %v688 = vpop.f32.mrf.mxu0
      %v689 = vadd.f32 0.0, %v688
      %v690 = vpop.f32.mrf.mxu0
      %v691 = vpop.f32.mrf.mxu0
      %v692 = vadd.f32 0.0, %v691
      %v693 = vpop.f32.mrf.mxu0
      %694 = vmatprep.mubr.bf16.mxu0 0
      %695 = vmatmul.mubr.bf16.gmra.mxu0 %v590
      %v696 = vpop.f32.mrf.mxu0
      %v697 = vadd.f32 0.0, %v696
      %v698 = vpop.f32.mrf.mxu0
      %v699 = vpop.f32.mrf.mxu0
      %v700 = vadd.f32 0.0, %v699
      %v701 = vpop.f32.mrf.mxu0
      %702 = vmatprep.mubr.bf16.mxu0 0
      %703 = vmatmul.mubr.bf16.gmra.mxu0 %v593
      %v704 = vpop.f32.mrf.mxu0
      %v705 = vadd.f32 0.0, %v704
      %v706 = vpop.f32.mrf.mxu0
      %v707 = vpop.f32.mrf.mxu0
      %v708 = vadd.f32 0.0, %v707
      %v709 = vpop.f32.mrf.mxu0
      %710 = vmatprep.mubr.bf16.mxu0 0
      %711 = vmatmul.mubr.bf16.gmra.mxu0 %v596
      %v712 = vpop.f32.mrf.mxu0
      %v713 = vadd.f32 0.0, %v712
      %v714 = vpop.f32.mrf.mxu0
      %v715 = vpop.f32.mrf.mxu0
      %v716 = vadd.f32 0.0, %v715
      %v717 = vpop.f32.mrf.mxu0
      %718 = vmatprep.mubr.bf16.mxu0 0
      %719 = vmatmul.mubr.bf16.gmra.mxu0 %v599
      %v720 = vpop.f32.mrf.mxu0
      %v721 = vadd.f32 0.0, %v720
      %v722 = vpop.f32.mrf.mxu0
      %v723 = vpop.f32.mrf.mxu0
      %v724 = vadd.f32 0.0, %v723
      %v725 = vpop.f32.mrf.mxu0
      %726 = vmatprep.mubr.bf16.mxu0 0
      %727 = vmatmul.mubr.bf16.gmra.mxu0 %v602
      %v728 = vpop.f32.mrf.mxu0
      %v729 = vadd.f32 0.0, %v728
      %v730 = vpop.f32.mrf.mxu0
      %v731 = vpop.f32.mrf.mxu0
      %v732 = vadd.f32 0.0, %v731
      %v733 = vpop.f32.mrf.mxu0
      %734 = vmatprep.mubr.bf16.mxu0 0
      %735 = vmatmul.mubr.bf16.gmra.mxu0 %v605
      %v736 = vpop.f32.mrf.mxu0
      %v737 = vadd.f32 0.0, %v736
      %v738 = vpop.f32.mrf.mxu0
      %v739 = vpop.f32.mrf.mxu0
      %v740 = vadd.f32 0.0, %v739
      %v741 = vpop.f32.mrf.mxu0
      %742 = vmatprep.mubr.bf16.mxu0 0
      %743 = vmatmul.mubr.bf16.gmra.mxu0 %v608
      %v744 = vpop.f32.mrf.mxu0
      %v745 = vadd.f32 0.0, %v744
      %v746 = vpop.f32.mrf.mxu0
      %v747 = vpop.f32.mrf.mxu0
      %v748 = vadd.f32 0.0, %v747
      %v749 = vpop.f32.mrf.mxu0
      %750 = vmatprep.mubr.bf16.mxu0 0
      %751 = vmatmul.mubr.bf16.gmra.mxu0 %v611
      %v752 = vpop.f32.mrf.mxu0
      %v753 = vadd.f32 0.0, %v752
      %v754 = vpop.f32.mrf.mxu0
      %v755 = vpop.f32.mrf.mxu0
      %v756 = vadd.f32 0.0, %v755
      %v757 = vpop.f32.mrf.mxu0
      %758 = vmatprep.mubr.bf16.mxu0 0
      %759 = vmatmul.mubr.bf16.gmra.mxu0 %v614
      %v760 = vpop.f32.mrf.mxu0
      %v761 = vadd.f32 0.0, %v760
      %v762 = vpop.f32.mrf.mxu0
      %v763 = vpop.f32.mrf.mxu0
      %v764 = vadd.f32 0.0, %v763
      %v765 = vpop.f32.mrf.mxu0
      %766 = vmatprep.mubr.bf16.mxu0 0
      %767 = vmatmul.mubr.bf16.gmra.mxu0 %v617
      %v768 = vpop.f32.mrf.mxu0
      %v769 = vadd.f32 0.0, %v768
      %v770 = vpop.f32.mrf.mxu0
      %v771 = vpop.f32.mrf.mxu0
      %v772 = vadd.f32 0.0, %v771
      %v773 = vpop.f32.mrf.mxu0
      %774 = vmatprep.mubr.bf16.mxu0 0
      %775 = vmatmul.mubr.bf16.gmra.mxu0 %v620
      %v776 = vpop.f32.mrf.mxu0
      %v777 = vadd.f32 0.0, %v776
      %v778 = vpop.f32.mrf.mxu0
      %v779 = vpop.f32.mrf.mxu0
      %v780 = vadd.f32 0.0, %v779
      %v781 = vpop.f32.mrf.mxu0
      %782 = vdwg.mxu0
      %v783 = vpack.c.bf16 %v660, %v657
      %v784 = vpack.c.bf16 %v668, %v665
      %v785 = vpack.c.bf16 %v676, %v673
      %v786 = vpack.c.bf16 %v684, %v681
      %v787 = vpack.c.bf16 %v692, %v689
      %v788 = vpack.c.bf16 %v700, %v697
      %v789 = vpack.c.bf16 %v708, %v705
      %v790 = vpack.c.bf16 %v716, %v713
      %v791 = vpack.c.bf16 %v724, %v721
      %v792 = vpack.c.bf16 %v732, %v729
      %v793 = vpack.c.bf16 %v740, %v737
      %v794 = vpack.c.bf16 %v748, %v745
      %v795 = vpack.c.bf16 %v756, %v753
      %v796 = vpack.c.bf16 %v764, %v761
      %v797 = vpack.c.bf16 %v772, %v769
      %v798 = vpack.c.bf16 %v780, %v777
      %v799 = vsub.bf16 0, %v783
      %v800 = vsub.bf16 0, %v784
      %v801 = vsub.bf16 0, %v785
      %v802 = vsub.bf16 0, %v786
      %v803 = vsub.bf16 0, %v787
      %v804 = vsub.bf16 0, %v788
      %v805 = vsub.bf16 0, %v789
      %v806 = vsub.bf16 0, %v790
      %v807 = vsub.bf16 0, %v791
      %v808 = vsub.bf16 0, %v792
      %v809 = vsub.bf16 0, %v793
      %v810 = vsub.bf16 0, %v794
      %v811 = vsub.bf16 0, %v795
      %v812 = vsub.bf16 0, %v796
      %v813 = vsub.bf16 0, %v797
      %v814 = vsub.bf16 0, %v798
      %v816 = vmul.bf16 %v799, 1069105081
      %v817 = vpow.bf16.pop %v816
      %v819 = vmul.bf16 %v800, 1069105081
      %v820 = vpow.bf16.pop %v819
      %v822 = vmul.bf16 %v801, 1069105081
      %v823 = vpow.bf16.pop %v822
      %v825 = vmul.bf16 %v802, 1069105081
      %v826 = vpow.bf16.pop %v825
      %v828 = vmul.bf16 %v803, 1069105081
      %v829 = vpow.bf16.pop %v828
      %v831 = vmul.bf16 %v804, 1069105081
      %v832 = vpow.bf16.pop %v831
      %v834 = vmul.bf16 %v805, 1069105081
      %v835 = vpow.bf16.pop %v834
      %v837 = vmul.bf16 %v806, 1069105081
      %v838 = vpow.bf16.pop %v837
      %v840 = vmul.bf16 %v807, 1069105081
      %v841 = vpow.bf16.pop %v840
      %v843 = vmul.bf16 %v808, 1069105081
      %v844 = vpow.bf16.pop %v843
      %v846 = vmul.bf16 %v809, 1069105081
      %v847 = vpow.bf16.pop %v846
      %v849 = vmul.bf16 %v810, 1069105081
      %v850 = vpow.bf16.pop %v849
      %v852 = vmul.bf16 %v811, 1069105081
      %v853 = vpow.bf16.pop %v852
      %v855 = vmul.bf16 %v812, 1069105081
      %v856 = vpow.bf16.pop %v855
      %v858 = vmul.bf16 %v813, 1069105081
      %v859 = vpow.bf16.pop %v858
      %v861 = vmul.bf16 %v814, 1069105081
      %v862 = vpow.bf16.pop %v861
      %v863 = vadd.bf16 %v817, 1065369472
      %v864 = vadd.bf16 %v820, 1065369472
      %v865 = vadd.bf16 %v823, 1065369472
      %v866 = vadd.bf16 %v826, 1065369472
      %v867 = vadd.bf16 %v829, 1065369472
      %v868 = vadd.bf16 %v832, 1065369472
      %v869 = vadd.bf16 %v835, 1065369472
      %v870 = vadd.bf16 %v838, 1065369472
      %v871 = vadd.bf16 %v841, 1065369472
      %v872 = vadd.bf16 %v844, 1065369472
      %v873 = vadd.bf16 %v847, 1065369472
      %v874 = vadd.bf16 %v850, 1065369472
      %v875 = vadd.bf16 %v853, 1065369472
      %v876 = vadd.bf16 %v856, 1065369472
      %v877 = vadd.bf16 %v859, 1065369472
      %v878 = vadd.bf16 %v862, 1065369472
      %v879 = vrcp.bf16.pop %v863
      %v880 = vmul.bf16 1065369472, %v879
      %v881 = vrcp.bf16.pop %v864
      %v882 = vmul.bf16 1065369472, %v881
      %v883 = vrcp.bf16.pop %v865
      %v884 = vmul.bf16 1065369472, %v883
      %v885 = vrcp.bf16.pop %v866
      %v886 = vmul.bf16 1065369472, %v885
      %v887 = vrcp.bf16.pop %v867
      %v888 = vmul.bf16 1065369472, %v887
      %v889 = vrcp.bf16.pop %v868
      %v890 = vmul.bf16 1065369472, %v889
      %v891 = vrcp.bf16.pop %v869
      %v892 = vmul.bf16 1065369472, %v891
      %v893 = vrcp.bf16.pop %v870
      %v894 = vmul.bf16 1065369472, %v893
      %v895 = vrcp.bf16.pop %v871
      %v896 = vmul.bf16 1065369472, %v895
      %v897 = vrcp.bf16.pop %v872
      %v898 = vmul.bf16 1065369472, %v897
      %v899 = vrcp.bf16.pop %v873
      %v900 = vmul.bf16 1065369472, %v899
      %v901 = vrcp.bf16.pop %v874
      %v902 = vmul.bf16 1065369472, %v901
      %v903 = vrcp.bf16.pop %v875
      %v904 = vmul.bf16 1065369472, %v903
      %v905 = vrcp.bf16.pop %v876
      %v906 = vmul.bf16 1065369472, %v905
      %v907 = vrcp.bf16.pop %v877
      %v908 = vmul.bf16 1065369472, %v907
      %v909 = vrcp.bf16.pop %v878
      %v910 = vmul.bf16 1065369472, %v909
      %v911 = vmul.bf16 %v783, %v880
      %v912 = vmul.bf16 %v784, %v882
      %v913 = vmul.bf16 %v785, %v884
      %v914 = vmul.bf16 %v786, %v886
      %v915 = vmul.bf16 %v787, %v888
      %v916 = vmul.bf16 %v788, %v890
      %v917 = vmul.bf16 %v789, %v892
      %v918 = vmul.bf16 %v790, %v894
      %v919 = vmul.bf16 %v791, %v896
      %v920 = vmul.bf16 %v792, %v898
      %v921 = vmul.bf16 %v793, %v900
      %v922 = vmul.bf16 %v794, %v902
      %v923 = vmul.bf16 %v795, %v904
      %v924 = vmul.bf16 %v796, %v906
      %v925 = vmul.bf16 %v797, %v908
      %v926 = vmul.bf16 %v798, %v910
      %v927 = vld [vmem:[%s2] sm:$0xf]
      %v928 = vld [vmem:[%s2 + $0x4] sm:$0xf]
      %v929 = vld [vmem:[%s2 + $0x8] sm:$0xf]
      %v930 = vld [vmem:[%s2 + $0xc] sm:$0xf]
      %v935 = vunpack.c.l.b16 %v927
      %v936 = vunpack.c.l.b16 %v928
      %v937 = vunpack.c.l.b16 %v929
      %v938 = vunpack.c.l.b16 %v930
      %v939 = vpack.c.b16 %v936, %v935
      %v940 = vpack.c.b16 %v938, %v937
      %v944 = vsel %vm573, %v911, 0
      %v947 = vsel %vm573, %v912, 0
      %v950 = vsel %vm573, %v913, 0
      %v953 = vsel %vm573, %v914, 0
      %v956 = vsel %vm573, %v915, 0
      %v959 = vsel %vm573, %v916, 0
      %v962 = vsel %vm573, %v917, 0
      %v965 = vsel %vm573, %v918, 0
      %v968 = vsel %vm573, %v919, 0
      %v971 = vsel %vm573, %v920, 0
      %v974 = vsel %vm573, %v921, 0
      %v977 = vsel %vm573, %v922, 0
      %v980 = vsel %vm573, %v923, 0
      %v983 = vsel %vm573, %v924, 0
      %v986 = vsel %vm573, %v925, 0
      %v989 = vsel %vm573, %v926, 0
      %991 = vmatprep.subr.bf16.mxu0 0
      %992 = vmatpush1.bf16.msra.mxu0 0
      %993 = vmatprep.subr.bf16.mxu0 0
      %994 = vmatpush1.bf16.msra.mxu0 0
      %995 = vmatprep.subr.bf16.mxu0 0
      %996 = vmatpush1.bf16.msra.mxu0 0
      %997 = vmatprep.subr.bf16.mxu0 0
      %998 = vmatpush1.bf16.msra.mxu0 0
      %999 = vmatprep.subr.bf16.mxu0 0
      %1000 = vmatpush1.bf16.msra.mxu0 0
      %1001 = vmatprep.subr.bf16.mxu0 0
      %1002 = vmatpush1.bf16.msra.mxu0 0
      %1003 = vmatprep.subr.bf16.mxu0 0
      %1004 = vmatpush1.bf16.msra.mxu0 %v940
      %1005 = vmatprep.subr.bf16.mxu0 0
      %1006 = vmatpush1.bf16.msra.mxu0 %v939
      %1007 = vmatprep.subr.bf16.mxu0 0
      %1008 = vmatpush2.bf16.msra.mxu0 0
      %1009 = vmatprep.subr.bf16.mxu0 0
      %1010 = vmatpush2.bf16.msra.mxu0 0
      %1011 = vmatprep.subr.bf16.mxu0 0
      %1012 = vmatpush2.bf16.msra.mxu0 0
      %1013 = vmatprep.subr.bf16.mxu0 0
      %1014 = vmatpush2.bf16.msra.mxu0 0
      %1015 = vmatprep.subr.bf16.mxu0 0
      %1016 = vmatpush2.bf16.msra.mxu0 0
      %1017 = vmatprep.subr.bf16.mxu0 0
      %1018 = vmatpush2.bf16.msra.mxu0 0
      %1019 = vmatprep.subr.bf16.mxu0 0
      %1020 = vmatpush2.bf16.msra.mxu0 0
      %1021 = vmatprep.subr.bf16.mxu0 0
      %1022 = vmatpush2.bf16.msra.mxu0 0
      %1023 = vmatprep.mubr.bf16.mxu0 0
      %1024 = vmatmul.mubr.bf16.gmra.mxu0 %v944
      %v1025 = vpop.f32.mrf.mxu0
      %v1026 = vadd.f32 0.0, %v1025
      %v1027 = vpop.f32.mrf.mxu0
      %v1028 = vpop.f32.mrf.mxu0
      %v1029 = vadd.f32 0.0, %v1028
      %v1030 = vpop.f32.mrf.mxu0
      %1031 = vmatprep.mubr.bf16.mxu0 0
      %1032 = vmatmul.mubr.bf16.gmra.mxu0 %v947
      %v1033 = vpop.f32.mrf.mxu0
      %v1034 = vadd.f32 0.0, %v1033
      %v1035 = vpop.f32.mrf.mxu0
      %v1036 = vpop.f32.mrf.mxu0
      %v1037 = vadd.f32 0.0, %v1036
      %v1038 = vpop.f32.mrf.mxu0
      %1039 = vmatprep.mubr.bf16.mxu0 0
      %1040 = vmatmul.mubr.bf16.gmra.mxu0 %v950
      %v1041 = vpop.f32.mrf.mxu0
      %v1042 = vadd.f32 0.0, %v1041
      %v1043 = vpop.f32.mrf.mxu0
      %v1044 = vpop.f32.mrf.mxu0
      %v1045 = vadd.f32 0.0, %v1044
      %v1046 = vpop.f32.mrf.mxu0
      %1047 = vmatprep.mubr.bf16.mxu0 0
      %1048 = vmatmul.mubr.bf16.gmra.mxu0 %v953
      %v1049 = vpop.f32.mrf.mxu0
      %v1050 = vadd.f32 0.0, %v1049
      %v1051 = vpop.f32.mrf.mxu0
      %v1052 = vpop.f32.mrf.mxu0
      %v1053 = vadd.f32 0.0, %v1052
      %v1054 = vpop.f32.mrf.mxu0
      %1055 = vmatprep.mubr.bf16.mxu0 0
      %1056 = vmatmul.mubr.bf16.gmra.mxu0 %v956
      %v1057 = vpop.f32.mrf.mxu0
      %v1058 = vadd.f32 0.0, %v1057
      %v1059 = vpop.f32.mrf.mxu0
      %v1060 = vpop.f32.mrf.mxu0
      %v1061 = vadd.f32 0.0, %v1060
      %v1062 = vpop.f32.mrf.mxu0
      %1063 = vmatprep.mubr.bf16.mxu0 0
      %1064 = vmatmul.mubr.bf16.gmra.mxu0 %v959
      %v1065 = vpop.f32.mrf.mxu0
      %v1066 = vadd.f32 0.0, %v1065
      %v1067 = vpop.f32.mrf.mxu0
      %v1068 = vpop.f32.mrf.mxu0
      %v1069 = vadd.f32 0.0, %v1068
      %v1070 = vpop.f32.mrf.mxu0
      %1071 = vmatprep.mubr.bf16.mxu0 0
      %1072 = vmatmul.mubr.bf16.gmra.mxu0 %v962
      %v1073 = vpop.f32.mrf.mxu0
      %v1074 = vadd.f32 0.0, %v1073
      %v1075 = vpop.f32.mrf.mxu0
      %v1076 = vpop.f32.mrf.mxu0
      %v1077 = vadd.f32 0.0, %v1076
      %v1078 = vpop.f32.mrf.mxu0
      %1079 = vmatprep.mubr.bf16.mxu0 0
      %1080 = vmatmul.mubr.bf16.gmra.mxu0 %v965
      %v1081 = vpop.f32.mrf.mxu0
      %v1082 = vadd.f32 0.0, %v1081
      %v1083 = vpop.f32.mrf.mxu0
      %v1084 = vpop.f32.mrf.mxu0
      %v1085 = vadd.f32 0.0, %v1084
      %v1086 = vpop.f32.mrf.mxu0
      %1087 = vmatprep.mubr.bf16.mxu0 0
      %1088 = vmatmul.mubr.bf16.gmra.mxu0 %v968
      %v1089 = vpop.f32.mrf.mxu0
      %v1090 = vadd.f32 0.0, %v1089
      %v1091 = vpop.f32.mrf.mxu0
      %v1092 = vpop.f32.mrf.mxu0
      %v1093 = vadd.f32 0.0, %v1092
      %v1094 = vpop.f32.mrf.mxu0
      %1095 = vmatprep.mubr.bf16.mxu0 0
      %1096 = vmatmul.mubr.bf16.gmra.mxu0 %v971
      %v1097 = vpop.f32.mrf.mxu0
      %v1098 = vadd.f32 0.0, %v1097
      %v1099 = vpop.f32.mrf.mxu0
      %v1100 = vpop.f32.mrf.mxu0
      %v1101 = vadd.f32 0.0, %v1100
      %v1102 = vpop.f32.mrf.mxu0
      %1103 = vmatprep.mubr.bf16.mxu0 0
      %1104 = vmatmul.mubr.bf16.gmra.mxu0 %v974
      %v1105 = vpop.f32.mrf.mxu0
      %v1106 = vadd.f32 0.0, %v1105
      %v1107 = vpop.f32.mrf.mxu0
      %v1108 = vpop.f32.mrf.mxu0
      %v1109 = vadd.f32 0.0, %v1108
      %v1110 = vpop.f32.mrf.mxu0
      %1111 = vmatprep.mubr.bf16.mxu0 0
      %1112 = vmatmul.mubr.bf16.gmra.mxu0 %v977
      %v1113 = vpop.f32.mrf.mxu0
      %v1114 = vadd.f32 0.0, %v1113
      %v1115 = vpop.f32.mrf.mxu0
      %v1116 = vpop.f32.mrf.mxu0
      %v1117 = vadd.f32 0.0, %v1116
      %v1118 = vpop.f32.mrf.mxu0
      %1119 = vmatprep.mubr.bf16.mxu0 0
      %1120 = vmatmul.mubr.bf16.gmra.mxu0 %v980
      %v1121 = vpop.f32.mrf.mxu0
      %v1122 = vadd.f32 0.0, %v1121
      %v1123 = vpop.f32.mrf.mxu0
      %v1124 = vpop.f32.mrf.mxu0
      %v1125 = vadd.f32 0.0, %v1124
      %v1126 = vpop.f32.mrf.mxu0
      %1127 = vmatprep.mubr.bf16.mxu0 0
      %1128 = vmatmul.mubr.bf16.gmra.mxu0 %v983
      %v1129 = vpop.f32.mrf.mxu0
      %v1130 = vadd.f32 0.0, %v1129
      %v1131 = vpop.f32.mrf.mxu0
      %v1132 = vpop.f32.mrf.mxu0
      %v1133 = vadd.f32 0.0, %v1132
      %v1134 = vpop.f32.mrf.mxu0
      %1135 = vmatprep.mubr.bf16.mxu0 0
      %1136 = vmatmul.mubr.bf16.gmra.mxu0 %v986
      %v1137 = vpop.f32.mrf.mxu0
      %v1138 = vadd.f32 0.0, %v1137
      %v1139 = vpop.f32.mrf.mxu0
      %v1140 = vpop.f32.mrf.mxu0
      %v1141 = vadd.f32 0.0, %v1140
      %v1142 = vpop.f32.mrf.mxu0
      %1143 = vmatprep.mubr.bf16.mxu0 0
      %1144 = vmatmul.mubr.bf16.gmra.mxu0 %v989
      %v1145 = vpop.f32.mrf.mxu0
      %v1146 = vadd.f32 0.0, %v1145
      %v1147 = vpop.f32.mrf.mxu0
      %v1148 = vpop.f32.mrf.mxu0
      %v1149 = vadd.f32 0.0, %v1148
      %v1150 = vpop.f32.mrf.mxu0
      %1151 = vdwg.mxu0
      %v1152 = vpack.c.bf16 %v1029, %v1026
      %v1153 = vpack.c.bf16 %v1037, %v1034
      %v1154 = vpack.c.bf16 %v1045, %v1042
      %v1155 = vpack.c.bf16 %v1053, %v1050
      %v1156 = vpack.c.bf16 %v1061, %v1058
      %v1157 = vpack.c.bf16 %v1069, %v1066
      %v1158 = vpack.c.bf16 %v1077, %v1074
      %v1159 = vpack.c.bf16 %v1085, %v1082
      %v1160 = vpack.c.bf16 %v1093, %v1090
      %v1161 = vpack.c.bf16 %v1101, %v1098
      %v1162 = vpack.c.bf16 %v1109, %v1106
      %v1163 = vpack.c.bf16 %v1117, %v1114
      %v1164 = vpack.c.bf16 %v1125, %v1122
      %v1165 = vpack.c.bf16 %v1133, %v1130
      %v1166 = vpack.c.bf16 %v1141, %v1138
      %v1167 = vpack.c.bf16 %v1149, %v1146
      %v1168 = vld [vmem:[%s3] sm:$0x1]
      %v1170 = vpack.i.b16 %v1168, %v1168
      %v1172 = vlaneseq
      %v1173 = vshrl.u32 %v1172, 7
      %v1174 = vsub.s32 0, %v1173
      %v1175 = vrot.slane %v1170, %v1174
      %v1176 = vadd.bf16 %v1152, %v1175
      %v1177 = vadd.bf16 %v1153, %v1175
      %v1178 = vadd.bf16 %v1154, %v1175
      %v1179 = vadd.bf16 %v1155, %v1175
      %v1180 = vadd.bf16 %v1156, %v1175
      %v1181 = vadd.bf16 %v1157, %v1175
      %v1182 = vadd.bf16 %v1158, %v1175
      %v1183 = vadd.bf16 %v1159, %v1175
      %v1184 = vadd.bf16 %v1160, %v1175
      %v1185 = vadd.bf16 %v1161, %v1175
      %v1186 = vadd.bf16 %v1162, %v1175
      %v1187 = vadd.bf16 %v1163, %v1175
      %v1188 = vadd.bf16 %v1164, %v1175
      %v1189 = vadd.bf16 %v1165, %v1175
      %v1190 = vadd.bf16 %v1166, %v1175
      %v1191 = vadd.bf16 %v1167, %v1175
      %v1192 = vsub.bf16 0, %v1176
      %v1193 = vsub.bf16 0, %v1177
      %v1194 = vsub.bf16 0, %v1178
      %v1195 = vsub.bf16 0, %v1179
      %v1196 = vsub.bf16 0, %v1180
      %v1197 = vsub.bf16 0, %v1181
      %v1198 = vsub.bf16 0, %v1182
      %v1199 = vsub.bf16 0, %v1183
      %v1200 = vsub.bf16 0, %v1184
      %v1201 = vsub.bf16 0, %v1185
      %v1202 = vsub.bf16 0, %v1186
      %v1203 = vsub.bf16 0, %v1187
      %v1204 = vsub.bf16 0, %v1188
      %v1205 = vsub.bf16 0, %v1189
      %v1206 = vsub.bf16 0, %v1190
      %v1207 = vsub.bf16 0, %v1191
      %v1209 = vmul.bf16 %v1192, 1069105081
      %v1210 = vpow.bf16.pop %v1209
      %v1212 = vmul.bf16 %v1193, 1069105081
      %v1213 = vpow.bf16.pop %v1212
      %v1215 = vmul.bf16 %v1194, 1069105081
      %v1216 = vpow.bf16.pop %v1215
      %v1218 = vmul.bf16 %v1195, 1069105081
      %v1219 = vpow.bf16.pop %v1218
      %v1221 = vmul.bf16 %v1196, 1069105081
      %v1222 = vpow.bf16.pop %v1221
      %v1224 = vmul.bf16 %v1197, 1069105081
      %v1225 = vpow.bf16.pop %v1224
      %v1227 = vmul.bf16 %v1198, 1069105081
      %v1228 = vpow.bf16.pop %v1227
      %v1230 = vmul.bf16 %v1199, 1069105081
      %v1231 = vpow.bf16.pop %v1230
      %v1233 = vmul.bf16 %v1200, 1069105081
      %v1234 = vpow.bf16.pop %v1233
      %v1236 = vmul.bf16 %v1201, 1069105081
      %v1237 = vpow.bf16.pop %v1236
      %v1239 = vmul.bf16 %v1202, 1069105081
      %v1240 = vpow.bf16.pop %v1239
      %v1242 = vmul.bf16 %v1203, 1069105081
      %v1243 = vpow.bf16.pop %v1242
      %v1245 = vmul.bf16 %v1204, 1069105081
      %v1246 = vpow.bf16.pop %v1245
      %v1248 = vmul.bf16 %v1205, 1069105081
      %v1249 = vpow.bf16.pop %v1248
      %v1251 = vmul.bf16 %v1206, 1069105081
      %v1252 = vpow.bf16.pop %v1251
      %v1254 = vmul.bf16 %v1207, 1069105081
      %v1255 = vpow.bf16.pop %v1254
      %v1256 = vadd.bf16 %v1210, 1065369472
      %v1257 = vadd.bf16 %v1213, 1065369472
      %v1258 = vadd.bf16 %v1216, 1065369472
      %v1259 = vadd.bf16 %v1219, 1065369472
      %v1260 = vadd.bf16 %v1222, 1065369472
      %v1261 = vadd.bf16 %v1225, 1065369472
      %v1262 = vadd.bf16 %v1228, 1065369472
      %v1263 = vadd.bf16 %v1231, 1065369472
      %v1264 = vadd.bf16 %v1234, 1065369472
      %v1265 = vadd.bf16 %v1237, 1065369472
      %v1266 = vadd.bf16 %v1240, 1065369472
      %v1267 = vadd.bf16 %v1243, 1065369472
      %v1268 = vadd.bf16 %v1246, 1065369472
      %v1269 = vadd.bf16 %v1249, 1065369472
      %v1270 = vadd.bf16 %v1252, 1065369472
      %v1271 = vadd.bf16 %v1255, 1065369472
      %v1272 = vrcp.bf16.pop %v1256
      %v1273 = vmul.bf16 1065369472, %v1272
      %v1274 = vrcp.bf16.pop %v1257
      %v1275 = vmul.bf16 1065369472, %v1274
      %v1276 = vrcp.bf16.pop %v1258
      %v1277 = vmul.bf16 1065369472, %v1276
      %v1278 = vrcp.bf16.pop %v1259
      %v1279 = vmul.bf16 1065369472, %v1278
      %v1280 = vrcp.bf16.pop %v1260
      %v1281 = vmul.bf16 1065369472, %v1280
      %v1282 = vrcp.bf16.pop %v1261
      %v1283 = vmul.bf16 1065369472, %v1282
      %v1284 = vrcp.bf16.pop %v1262
      %v1285 = vmul.bf16 1065369472, %v1284
      %v1286 = vrcp.bf16.pop %v1263
      %v1287 = vmul.bf16 1065369472, %v1286
      %v1288 = vrcp.bf16.pop %v1264
      %v1289 = vmul.bf16 1065369472, %v1288
      %v1290 = vrcp.bf16.pop %v1265
      %v1291 = vmul.bf16 1065369472, %v1290
      %v1292 = vrcp.bf16.pop %v1266
      %v1293 = vmul.bf16 1065369472, %v1292
      %v1294 = vrcp.bf16.pop %v1267
      %v1295 = vmul.bf16 1065369472, %v1294
      %v1296 = vrcp.bf16.pop %v1268
      %v1297 = vmul.bf16 1065369472, %v1296
      %v1298 = vrcp.bf16.pop %v1269
      %v1299 = vmul.bf16 1065369472, %v1298
      %v1300 = vrcp.bf16.pop %v1270
      %v1301 = vmul.bf16 1065369472, %v1300
      %v1302 = vrcp.bf16.pop %v1271
      %v1303 = vmul.bf16 1065369472, %v1302
      %v1304 = vmul.bf16 %v1176, %v1273
      %v1305 = vmul.bf16 %v1177, %v1275
      %v1306 = vmul.bf16 %v1178, %v1277
      %v1307 = vmul.bf16 %v1179, %v1279
      %v1308 = vmul.bf16 %v1180, %v1281
      %v1309 = vmul.bf16 %v1181, %v1283
      %v1310 = vmul.bf16 %v1182, %v1285
      %v1311 = vmul.bf16 %v1183, %v1287
      %v1312 = vmul.bf16 %v1184, %v1289
      %v1313 = vmul.bf16 %v1185, %v1291
      %v1314 = vmul.bf16 %v1186, %v1293
      %v1315 = vmul.bf16 %v1187, %v1295
      %v1316 = vmul.bf16 %v1188, %v1297
      %v1317 = vmul.bf16 %v1189, %v1299
      %v1318 = vmul.bf16 %v1190, %v1301
      %v1319 = vmul.bf16 %v1191, %v1303
      %v1320 = vld [vmem:[#allocation2] sm:$0x1]
      %v1321 = vunpack.c.l.bf16 %v1304
      %v1322 = vunpack.c.h.bf16 %v1304
      %v1323 = vunpack.c.l.bf16 %v1305
      %v1324 = vunpack.c.h.bf16 %v1305
      %v1325 = vunpack.c.l.bf16 %v1306
      %v1326 = vunpack.c.h.bf16 %v1306
      %v1327 = vunpack.c.l.bf16 %v1307
      %v1328 = vunpack.c.h.bf16 %v1307
      %v1329 = vunpack.c.l.bf16 %v1308
      %v1330 = vunpack.c.h.bf16 %v1308
      %v1331 = vunpack.c.l.bf16 %v1309
      %v1332 = vunpack.c.h.bf16 %v1309
      %v1333 = vunpack.c.l.bf16 %v1310
      %v1334 = vunpack.c.h.bf16 %v1310
      %v1335 = vunpack.c.l.bf16 %v1311
      %v1336 = vunpack.c.h.bf16 %v1311
      %v1337 = vunpack.c.l.bf16 %v1312
      %v1338 = vunpack.c.h.bf16 %v1312
      %v1339 = vunpack.c.l.bf16 %v1313
      %v1340 = vunpack.c.h.bf16 %v1313
      %v1341 = vunpack.c.l.bf16 %v1314
      %v1342 = vunpack.c.h.bf16 %v1314
      %v1343 = vunpack.c.l.bf16 %v1315
      %v1344 = vunpack.c.h.bf16 %v1315
      %v1345 = vunpack.c.l.bf16 %v1316
      %v1346 = vunpack.c.h.bf16 %v1316
      %v1347 = vunpack.c.l.bf16 %v1317
      %v1348 = vunpack.c.h.bf16 %v1317
      %v1349 = vunpack.c.l.bf16 %v1318
      %v1350 = vunpack.c.h.bf16 %v1318
      %v1351 = vunpack.c.l.bf16 %v1319
      %v1352 = vunpack.c.h.bf16 %v1319
      %v1353 = vadd.f32 %v1321, %v1322
      %v1354 = vadd.f32 %v1353, %v1323
      %v1355 = vadd.f32 %v1354, %v1324
      %v1356 = vadd.f32 %v1355, %v1325
      %v1357 = vadd.f32 %v1356, %v1326
      %v1358 = vadd.f32 %v1357, %v1327
      %v1359 = vadd.f32 %v1358, %v1328
      %v1360 = vadd.f32 %v1359, %v1329
      %v1361 = vadd.f32 %v1360, %v1330
      %v1362 = vadd.f32 %v1361, %v1331
      %v1363 = vadd.f32 %v1362, %v1332
      %v1364 = vadd.f32 %v1363, %v1333
      %v1365 = vadd.f32 %v1364, %v1334
      %v1366 = vadd.f32 %v1365, %v1335
      %v1367 = vadd.f32 %v1366, %v1336
      %v1368 = vadd.f32 %v1367, %v1337
      %v1369 = vadd.f32 %v1368, %v1338
      %v1370 = vadd.f32 %v1369, %v1339
      %v1371 = vadd.f32 %v1370, %v1340
      %v1372 = vadd.f32 %v1371, %v1341
      %v1373 = vadd.f32 %v1372, %v1342
      %v1374 = vadd.f32 %v1373, %v1343
      %v1375 = vadd.f32 %v1374, %v1344
      %v1376 = vadd.f32 %v1375, %v1345
      %v1377 = vadd.f32 %v1376, %v1346
      %v1378 = vadd.f32 %v1377, %v1347
      %v1379 = vadd.f32 %v1378, %v1348
      %v1380 = vadd.f32 %v1379, %v1349
      %v1381 = vadd.f32 %v1380, %v1350
      %v1382 = vadd.f32 %v1381, %v1351
      %v1383 = vadd.f32 %v1382, %v1352
      %v1384 = vrot.slane %v1383, 4
      %v1385 = vadd.f32 %v1383, %v1384
      %v1386 = vrot.slane %v1385, 2
      %v1387 = vadd.f32 %v1385, %v1386
      %v1388 = vrot.slane %v1387, 1
      %v1389 = vadd.f32 %v1387, %v1388
      %v1390 = vadd.f32 %v1320, %v1389
      %1391 = vst [vmem:[#allocation2] sm:$0x1] %v1390
      // Predicated region
      $region73: #{bone_age_forward.1} parent=67 // pred_check
        %p1392 = pneg %p440
      $region74: #{bone_age_forward.1} parent=67 // pred_check_branch
        %1394 = sbr.rel (%p1392) target = $region76
      $region75: #{bone_age_forward.1} parent=67 // pred_region
        %v1395 = vld [vmem:[#allocation2] sm:$0x1]
        %v1396 = vmul.f32 %v1395, 0.00390625
        %v1397 = vpack.c.bf16 %v1396, %v1396
        %v1398 = vld [vmem:[%s4] sm:$0xff]
        %v1399 = vld [vmem:[%s4 + $0x8] sm:$0xff]
        %v1400 = vld [vmem:[%s4 + $0x10] sm:$0xff]
        %v1401 = vld [vmem:[%s4 + $0x18] sm:$0xff]
        %v1402 = vld [vmem:[%s4 + $0x20] sm:$0xff]
        %v1403 = vld [vmem:[%s4 + $0x28] sm:$0xff]
        %v1404 = vld [vmem:[%s4 + $0x30] sm:$0xff]
        %v1405 = vld [vmem:[%s4 + $0x38] sm:$0xff]
        %v1406 = vld [vmem:[%s4 + $0x40] sm:$0xff]
        %v1407 = vld [vmem:[%s4 + $0x48] sm:$0xff]
        %v1408 = vld [vmem:[%s4 + $0x50] sm:$0xff]
        %v1409 = vld [vmem:[%s4 + $0x58] sm:$0xff]
        %v1410 = vld [vmem:[%s4 + $0x60] sm:$0xff]
        %v1411 = vld [vmem:[%s4 + $0x68] sm:$0xff]
        %v1412 = vld [vmem:[%s4 + $0x70] sm:$0xff]
        %v1413 = vld [vmem:[%s4 + $0x78] sm:$0xff]
        %v1414 = vld [vmem:[%s4 + $0x80] sm:$0xff]
        %v1415 = vld [vmem:[%s4 + $0x88] sm:$0xff]
        %v1416 = vld [vmem:[%s4 + $0x90] sm:$0xff]
        %v1417 = vld [vmem:[%s4 + $0x98] sm:$0xff]
        %v1418 = vld [vmem:[%s4 + $0xa0] sm:$0xff]
        %v1419 = vld [vmem:[%s4 + $0xa8] sm:$0xff]
        %v1420 = vld [vmem:[%s4 + $0xb0] sm:$0xff]
        %v1421 = vld [vmem:[%s4 + $0xb8] sm:$0xff]
        %v1422 = vld [vmem:[%s4 + $0xc0] sm:$0xff]
        %v1423 = vld [vmem:[%s4 + $0xc8] sm:$0xff]
        %v1424 = vld [vmem:[%s4 + $0xd0] sm:$0xff]
        %v1425 = vld [vmem:[%s4 + $0xd8] sm:$0xff]
        %v1426 = vld [vmem:[%s4 + $0xe0] sm:$0xff]
        %v1427 = vld [vmem:[%s4 + $0xe8] sm:$0xff]
        %v1428 = vld [vmem:[%s4 + $0xf0] sm:$0xff]
        %v1429 = vld [vmem:[%s4 + $0xf8] sm:$0xff]
        %v1430 = vld [vmem:[%s5] sm:$0xf]
        %v1463 = vunpack.c.l.b16 %v1398
        %v1464 = vunpack.c.h.b16 %v1398
        %v1465 = vunpack.c.l.b16 %v1399
        %v1466 = vunpack.c.h.b16 %v1399
        %v1467 = vunpack.c.l.b16 %v1400
        %v1468 = vunpack.c.h.b16 %v1400
        %v1469 = vunpack.c.l.b16 %v1401
        %v1470 = vunpack.c.h.b16 %v1401
        %v1471 = vunpack.c.l.b16 %v1402
        %v1472 = vunpack.c.h.b16 %v1402
        %v1473 = vunpack.c.l.b16 %v1403
        %v1474 = vunpack.c.h.b16 %v1403
        %v1475 = vunpack.c.l.b16 %v1404
        %v1476 = vunpack.c.h.b16 %v1404
        %v1477 = vunpack.c.l.b16 %v1405
        %v1478 = vunpack.c.h.b16 %v1405
        %v1479 = vunpack.c.l.b16 %v1406
        %v1480 = vunpack.c.h.b16 %v1406
        %v1481 = vunpack.c.l.b16 %v1407
        %v1482 = vunpack.c.h.b16 %v1407
        %v1483 = vunpack.c.l.b16 %v1408
        %v1484 = vunpack.c.h.b16 %v1408
        %v1485 = vunpack.c.l.b16 %v1409
        %v1486 = vunpack.c.h.b16 %v1409
        %v1487 = vunpack.c.l.b16 %v1410
        %v1488 = vunpack.c.h.b16 %v1410
        %v1489 = vunpack.c.l.b16 %v1411
        %v1490 = vunpack.c.h.b16 %v1411
        %v1491 = vunpack.c.l.b16 %v1412
        %v1492 = vunpack.c.h.b16 %v1412
        %v1493 = vunpack.c.l.b16 %v1413
        %v1494 = vunpack.c.h.b16 %v1413
        %v1495 = vunpack.c.l.b16 %v1414
        %v1496 = vunpack.c.h.b16 %v1414
        %v1497 = vunpack.c.l.b16 %v1415
        %v1498 = vunpack.c.h.b16 %v1415
        %v1499 = vunpack.c.l.b16 %v1416
        %v1500 = vunpack.c.h.b16 %v1416
        %v1501 = vunpack.c.l.b16 %v1417
        %v1502 = vunpack.c.h.b16 %v1417
        %v1503 = vunpack.c.l.b16 %v1418
        %v1504 = vunpack.c.h.b16 %v1418
        %v1505 = vunpack.c.l.b16 %v1419
        %v1506 = vunpack.c.h.b16 %v1419
        %v1507 = vunpack.c.l.b16 %v1420
        %v1508 = vunpack.c.h.b16 %v1420
        %v1509 = vunpack.c.l.b16 %v1421
        %v1510 = vunpack.c.h.b16 %v1421
        %v1511 = vunpack.c.l.b16 %v1422
        %v1512 = vunpack.c.h.b16 %v1422
        %v1513 = vunpack.c.l.b16 %v1423
        %v1514 = vunpack.c.h.b16 %v1423
        %v1515 = vunpack.c.l.b16 %v1424
        %v1516 = vunpack.c.h.b16 %v1424
        %v1517 = vunpack.c.l.b16 %v1425
        %v1518 = vunpack.c.h.b16 %v1425
        %v1519 = vunpack.c.l.b16 %v1426
        %v1520 = vunpack.c.h.b16 %v1426
        %v1521 = vunpack.c.l.b16 %v1427
        %v1522 = vunpack.c.h.b16 %v1427
        %v1523 = vunpack.c.l.b16 %v1428
        %v1524 = vunpack.c.h.b16 %v1428
        %v1525 = vunpack.c.l.b16 %v1429
        %v1526 = vunpack.c.h.b16 %v1429
        %v1527 = vpack.c.b16 %v1467, %v1463
        %v1528 = vpack.c.b16 %v1468, %v1464
        %v1529 = vpack.c.b16 %v1469, %v1465
        %v1530 = vpack.c.b16 %v1470, %v1466
        %v1531 = vpack.c.b16 %v1475, %v1471
        %v1532 = vpack.c.b16 %v1476, %v1472
        %v1533 = vpack.c.b16 %v1477, %v1473
        %v1534 = vpack.c.b16 %v1478, %v1474
        %v1535 = vpack.c.b16 %v1483, %v1479
        %v1536 = vpack.c.b16 %v1484, %v1480
        %v1537 = vpack.c.b16 %v1485, %v1481
        %v1538 = vpack.c.b16 %v1486, %v1482
        %v1539 = vpack.c.b16 %v1491, %v1487
        %v1540 = vpack.c.b16 %v1492, %v1488
        %v1541 = vpack.c.b16 %v1493, %v1489
        %v1542 = vpack.c.b16 %v1494, %v1490
        %v1543 = vpack.c.b16 %v1499, %v1495
        %v1544 = vpack.c.b16 %v1500, %v1496
        %v1545 = vpack.c.b16 %v1501, %v1497
        %v1546 = vpack.c.b16 %v1502, %v1498
        %v1547 = vpack.c.b16 %v1507, %v1503
        %v1548 = vpack.c.b16 %v1508, %v1504
        %v1549 = vpack.c.b16 %v1509, %v1505
        %v1550 = vpack.c.b16 %v1510, %v1506
        %v1551 = vpack.c.b16 %v1515, %v1511
        %v1552 = vpack.c.b16 %v1516, %v1512
        %v1553 = vpack.c.b16 %v1517, %v1513
        %v1554 = vpack.c.b16 %v1518, %v1514
        %v1555 = vpack.c.b16 %v1523, %v1519
        %v1556 = vpack.c.b16 %v1524, %v1520
        %v1557 = vpack.c.b16 %v1525, %v1521
        %v1558 = vpack.c.b16 %v1526, %v1522
        %v1592 = vlaneseq
        %v1593 = vshrl.u32 %v1592, 7
        %v1594 = vsub.s32 0, %v1593
        %v1595 = vrot.slane %v1430, %v1594
        %v1596 = vlaneseq
        %v1597 = vshrl.u32 %v1596, 7
        %v1598 = vsub.s32 1, %v1597
        %v1599 = vrot.slane %v1430, %v1598
        %v1600 = vlaneseq
        %v1601 = vshrl.u32 %v1600, 7
        %v1602 = vsub.s32 2, %v1601
        %v1603 = vrot.slane %v1430, %v1602
        %v1604 = vlaneseq
        %v1605 = vshrl.u32 %v1604, 7
        %v1606 = vsub.s32 3, %v1605
        %v1607 = vrot.slane %v1430, %v1606
        %1612 = vmatprep.subr.bf16.mxu0 %v1556
        %1613 = vmatpush1.bf16.msra.mxu0 %v1555
        %1614 = vmatprep.subr.bf16.mxu0 %v1552
        %1615 = vmatpush1.bf16.msra.mxu0 %v1551
        %1616 = vmatprep.subr.bf16.mxu0 %v1548
        %1617 = vmatpush1.bf16.msra.mxu0 %v1547
        %1618 = vmatprep.subr.bf16.mxu0 %v1544
        %1619 = vmatpush1.bf16.msra.mxu0 %v1543
        %1620 = vmatprep.subr.bf16.mxu0 %v1540
        %1621 = vmatpush1.bf16.msra.mxu0 %v1539
        %1622 = vmatprep.subr.bf16.mxu0 %v1536
        %1623 = vmatpush1.bf16.msra.mxu0 %v1535
        %1624 = vmatprep.subr.bf16.mxu0 %v1532
        %1625 = vmatpush1.bf16.msra.mxu0 %v1531
        %1626 = vmatprep.subr.bf16.mxu0 %v1528
        %1627 = vmatpush1.bf16.msra.mxu0 %v1527
        %1628 = vmatprep.subr.bf16.mxu0 0
        %1629 = vmatpush2.bf16.msra.mxu0 0
        %1630 = vmatprep.subr.bf16.mxu0 0
        %1631 = vmatpush2.bf16.msra.mxu0 0
        %1632 = vmatprep.subr.bf16.mxu0 0
        %1633 = vmatpush2.bf16.msra.mxu0 0
        %1634 = vmatprep.subr.bf16.mxu0 0
        %1635 = vmatpush2.bf16.msra.mxu0 0
        %1636 = vmatprep.subr.bf16.mxu0 0
        %1637 = vmatpush2.bf16.msra.mxu0 0
        %1638 = vmatprep.subr.bf16.mxu0 0
        %1639 = vmatpush2.bf16.msra.mxu0 0
        %1640 = vmatprep.subr.bf16.mxu0 0
        %1641 = vmatpush2.bf16.msra.mxu0 0
        %1642 = vmatprep.subr.bf16.mxu0 0
        %1643 = vmatpush2.bf16.msra.mxu0 0
        %1644 = vmatprep.mubr.bf16.mxu0 0
        %1645 = vmatmul.mubr.bf16.gmra.mxu0 %v1397
        %v1646 = vpop.f32.mrf.mxu0
        %v1647 = vadd.f32 %v1595, %v1646
        %v1648 = vpop.f32.mrf.mxu0
        %v1649 = vadd.f32 %v1599, %v1648
        %v1650 = vpop.f32.mrf.mxu0
        %v1651 = vpop.f32.mrf.mxu0
        %1652 = vdwg.mxu0
        %1653 = vmatprep.subr.bf16.mxu0 %v1558
        %1654 = vmatpush1.bf16.msra.mxu0 %v1557
        %1655 = vmatprep.subr.bf16.mxu0 %v1554
        %1656 = vmatpush1.bf16.msra.mxu0 %v1553
        %1657 = vmatprep.subr.bf16.mxu0 %v1550
        %1658 = vmatpush1.bf16.msra.mxu0 %v1549
        %1659 = vmatprep.subr.bf16.mxu0 %v1546
        %1660 = vmatpush1.bf16.msra.mxu0 %v1545
        %1661 = vmatprep.subr.bf16.mxu0 %v1542
        %1662 = vmatpush1.bf16.msra.mxu0 %v1541
        %1663 = vmatprep.subr.bf16.mxu0 %v1538
        %1664 = vmatpush1.bf16.msra.mxu0 %v1537
        %1665 = vmatprep.subr.bf16.mxu0 %v1534
        %1666 = vmatpush1.bf16.msra.mxu0 %v1533
        %1667 = vmatprep.subr.bf16.mxu0 %v1530
        %1668 = vmatpush1.bf16.msra.mxu0 %v1529
        %1669 = vmatprep.subr.bf16.mxu0 0
        %1670 = vmatpush2.bf16.msra.mxu0 0
        %1671 = vmatprep.subr.bf16.mxu0 0
        %1672 = vmatpush2.bf16.msra.mxu0 0
        %1673 = vmatprep.subr.bf16.mxu0 0
        %1674 = vmatpush2.bf16.msra.mxu0 0
        %1675 = vmatprep.subr.bf16.mxu0 0
        %1676 = vmatpush2.bf16.msra.mxu0 0
        %1677 = vmatprep.subr.bf16.mxu0 0
        %1678 = vmatpush2.bf16.msra.mxu0 0
        %1679 = vmatprep.subr.bf16.mxu0 0
        %1680 = vmatpush2.bf16.msra.mxu0 0
        %1681 = vmatprep.subr.bf16.mxu0 0
        %1682 = vmatpush2.bf16.msra.mxu0 0
        %1683 = vmatprep.subr.bf16.mxu0 0
        %1684 = vmatpush2.bf16.msra.mxu0 0
        %1685 = vmatprep.mubr.bf16.mxu0 0
        %1686 = vmatmul.mubr.bf16.gmra.mxu0 %v1397
        %v1687 = vpop.f32.mrf.mxu0
        %v1688 = vadd.f32 %v1603, %v1687
        %v1689 = vpop.f32.mrf.mxu0
        %v1690 = vadd.f32 %v1607, %v1689
        %v1691 = vpop.f32.mrf.mxu0
        %v1692 = vpop.f32.mrf.mxu0
        %1693 = vdwg.mxu0
        %v1694 = vmax.f32 %v1647, 0.0
        %v1695 = vmax.f32 %v1649, 0.0
        %v1696 = vmax.f32 %v1688, 0.0
        %v1697 = vmax.f32 %v1690, 0.0
        %v1698 = vpack.c.bf16 %v1694, %v1694
        %v1699 = vpack.c.bf16 %v1695, %v1695
        %v1700 = vpack.c.bf16 %v1696, %v1696
        %v1701 = vpack.c.bf16 %v1697, %v1697
        %v1702 = vld [vmem:[%s6] sm:$0xff]
        %v1703 = vld [vmem:[%s6 + $0x8] sm:$0xff]
        %v1704 = vld [vmem:[%s6 + $0x10] sm:$0xff]
        %v1705 = vld [vmem:[%s6 + $0x18] sm:$0xff]
        %v1706 = vld [vmem:[%s6 + $0x20] sm:$0xff]
        %v1707 = vld [vmem:[%s6 + $0x28] sm:$0xff]
        %v1708 = vld [vmem:[%s6 + $0x30] sm:$0xff]
        %v1709 = vld [vmem:[%s6 + $0x38] sm:$0xff]
        %v1710 = vld [vmem:[%s6 + $0x40] sm:$0xff]
        %v1711 = vld [vmem:[%s6 + $0x48] sm:$0xff]
        %v1712 = vld [vmem:[%s6 + $0x50] sm:$0xff]
        %v1713 = vld [vmem:[%s6 + $0x58] sm:$0xff]
        %v1714 = vld [vmem:[%s6 + $0x60] sm:$0xff]
        %v1715 = vld [vmem:[%s6 + $0x68] sm:$0xff]
        %v1716 = vld [vmem:[%s6 + $0x70] sm:$0xff]
        %v1717 = vld [vmem:[%s6 + $0x78] sm:$0xff]
        %v1718 = vld [vmem:[%s6 + $0x80] sm:$0xff]
        %v1719 = vld [vmem:[%s6 + $0x88] sm:$0xff]
        %v1720 = vld [vmem:[%s6 + $0x90] sm:$0xff]
        %v1721 = vld [vmem:[%s6 + $0x98] sm:$0xff]
        %v1722 = vld [vmem:[%s6 + $0xa0] sm:$0xff]
        %v1723 = vld [vmem:[%s6 + $0xa8] sm:$0xff]
        %v1724 = vld [vmem:[%s6 + $0xb0] sm:$0xff]
        %v1725 = vld [vmem:[%s6 + $0xb8] sm:$0xff]
        %v1726 = vld [vmem:[%s6 + $0xc0] sm:$0xff]
        %v1727 = vld [vmem:[%s6 + $0xc8] sm:$0xff]
        %v1728 = vld [vmem:[%s6 + $0xd0] sm:$0xff]
        %v1729 = vld [vmem:[%s6 + $0xd8] sm:$0xff]
        %v1730 = vld [vmem:[%s6 + $0xe0] sm:$0xff]
        %v1731 = vld [vmem:[%s6 + $0xe8] sm:$0xff]
        %v1732 = vld [vmem:[%s6 + $0xf0] sm:$0xff]
        %v1733 = vld [vmem:[%s6 + $0xf8] sm:$0xff]
        %v1734 = vld [vmem:[%s6 + $0x100] sm:$0xff]
        %v1735 = vld [vmem:[%s6 + $0x108] sm:$0xff]
        %v1736 = vld [vmem:[%s6 + $0x110] sm:$0xff]
        %v1737 = vld [vmem:[%s6 + $0x118] sm:$0xff]
        %v1738 = vld [vmem:[%s6 + $0x120] sm:$0xff]
        %v1739 = vld [vmem:[%s6 + $0x128] sm:$0xff]
        %v1740 = vld [vmem:[%s6 + $0x130] sm:$0xff]
        %v1741 = vld [vmem:[%s6 + $0x138] sm:$0xff]
        %v1742 = vld [vmem:[%s6 + $0x140] sm:$0xff]
        %v1743 = vld [vmem:[%s6 + $0x148] sm:$0xff]
        %v1744 = vld [vmem:[%s6 + $0x150] sm:$0xff]
        %v1745 = vld [vmem:[%s6 + $0x158] sm:$0xff]
        %v1746 = vld [vmem:[%s6 + $0x160] sm:$0xff]
        %v1747 = vld [vmem:[%s6 + $0x168] sm:$0xff]
        %v1748 = vld [vmem:[%s6 + $0x170] sm:$0xff]
        %v1749 = vld [vmem:[%s6 + $0x178] sm:$0xff]
        %v1750 = vld [vmem:[%s6 + $0x180] sm:$0xff]
        %v1751 = vld [vmem:[%s6 + $0x188] sm:$0xff]
        %v1752 = vld [vmem:[%s6 + $0x190] sm:$0xff]
        %v1753 = vld [vmem:[%s6 + $0x198] sm:$0xff]
        %v1754 = vld [vmem:[%s6 + $0x1a0] sm:$0xff]
        %v1755 = vld [vmem:[%s6 + $0x1a8] sm:$0xff]
        %v1756 = vld [vmem:[%s6 + $0x1b0] sm:$0xff]
        %v1757 = vld [vmem:[%s6 + $0x1b8] sm:$0xff]
        %v1758 = vld [vmem:[%s6 + $0x1c0] sm:$0xff]
        %v1759 = vld [vmem:[%s6 + $0x1c8] sm:$0xff]
        %v1760 = vld [vmem:[%s6 + $0x1d0] sm:$0xff]
        %v1761 = vld [vmem:[%s6 + $0x1d8] sm:$0xff]
        %v1762 = vld [vmem:[%s6 + $0x1e0] sm:$0xff]
        %v1763 = vld [vmem:[%s6 + $0x1e8] sm:$0xff]
        %v1764 = vld [vmem:[%s6 + $0x1f0] sm:$0xff]
        %v1765 = vld [vmem:[%s6 + $0x1f8] sm:$0xff]
        %v1766 = vld [vmem:[%s7] sm:$0x3]
        %v1831 = vunpack.c.l.b16 %v1702
        %v1832 = vunpack.c.h.b16 %v1702
        %v1833 = vunpack.c.l.b16 %v1703
        %v1834 = vunpack.c.h.b16 %v1703
        %v1835 = vunpack.c.l.b16 %v1704
        %v1836 = vunpack.c.h.b16 %v1704
        %v1837 = vunpack.c.l.b16 %v1705
        %v1838 = vunpack.c.h.b16 %v1705
        %v1839 = vunpack.c.l.b16 %v1706
        %v1840 = vunpack.c.h.b16 %v1706
        %v1841 = vunpack.c.l.b16 %v1707
        %v1842 = vunpack.c.h.b16 %v1707
        %v1843 = vunpack.c.l.b16 %v1708
        %v1844 = vunpack.c.h.b16 %v1708
        %v1845 = vunpack.c.l.b16 %v1709
        %v1846 = vunpack.c.h.b16 %v1709
        %v1847 = vunpack.c.l.b16 %v1710
        %v1848 = vunpack.c.h.b16 %v1710
        %v1849 = vunpack.c.l.b16 %v1711
        %v1850 = vunpack.c.h.b16 %v1711
        %v1851 = vunpack.c.l.b16 %v1712
        %v1852 = vunpack.c.h.b16 %v1712
        %v1853 = vunpack.c.l.b16 %v1713
        %v1854 = vunpack.c.h.b16 %v1713
        %v1855 = vunpack.c.l.b16 %v1714
        %v1856 = vunpack.c.h.b16 %v1714
        %v1857 = vunpack.c.l.b16 %v1715
        %v1858 = vunpack.c.h.b16 %v1715
        %v1859 = vunpack.c.l.b16 %v1716
        %v1860 = vunpack.c.h.b16 %v1716
        %v1861 = vunpack.c.l.b16 %v1717
        %v1862 = vunpack.c.h.b16 %v1717
        %v1863 = vunpack.c.l.b16 %v1718
        %v1864 = vunpack.c.h.b16 %v1718
        %v1865 = vunpack.c.l.b16 %v1719
        %v1866 = vunpack.c.h.b16 %v1719
        %v1867 = vunpack.c.l.b16 %v1720
        %v1868 = vunpack.c.h.b16 %v1720
        %v1869 = vunpack.c.l.b16 %v1721
        %v1870 = vunpack.c.h.b16 %v1721
        %v1871 = vunpack.c.l.b16 %v1722
        %v1872 = vunpack.c.h.b16 %v1722
        %v1873 = vunpack.c.l.b16 %v1723
        %v1874 = vunpack.c.h.b16 %v1723
        %v1875 = vunpack.c.l.b16 %v1724
        %v1876 = vunpack.c.h.b16 %v1724
        %v1877 = vunpack.c.l.b16 %v1725
        %v1878 = vunpack.c.h.b16 %v1725
        %v1879 = vunpack.c.l.b16 %v1726
        %v1880 = vunpack.c.h.b16 %v1726
        %v1881 = vunpack.c.l.b16 %v1727
        %v1882 = vunpack.c.h.b16 %v1727
        %v1883 = vunpack.c.l.b16 %v1728
        %v1884 = vunpack.c.h.b16 %v1728
        %v1885 = vunpack.c.l.b16 %v1729
        %v1886 = vunpack.c.h.b16 %v1729
        %v1887 = vunpack.c.l.b16 %v1730
        %v1888 = vunpack.c.h.b16 %v1730
        %v1889 = vunpack.c.l.b16 %v1731
        %v1890 = vunpack.c.h.b16 %v1731
        %v1891 = vunpack.c.l.b16 %v1732
        %v1892 = vunpack.c.h.b16 %v1732
        %v1893 = vunpack.c.l.b16 %v1733
        %v1894 = vunpack.c.h.b16 %v1733
        %v1895 = vunpack.c.l.b16 %v1734
        %v1896 = vunpack.c.h.b16 %v1734
        %v1897 = vunpack.c.l.b16 %v1735
        %v1898 = vunpack.c.h.b16 %v1735
        %v1899 = vunpack.c.l.b16 %v1736
        %v1900 = vunpack.c.h.b16 %v1736
        %v1901 = vunpack.c.l.b16 %v1737
        %v1902 = vunpack.c.h.b16 %v1737
        %v1903 = vunpack.c.l.b16 %v1738
        %v1904 = vunpack.c.h.b16 %v1738
        %v1905 = vunpack.c.l.b16 %v1739
        %v1906 = vunpack.c.h.b16 %v1739
        %v1907 = vunpack.c.l.b16 %v1740
        %v1908 = vunpack.c.h.b16 %v1740
        %v1909 = vunpack.c.l.b16 %v1741
        %v1910 = vunpack.c.h.b16 %v1741
        %v1911 = vunpack.c.l.b16 %v1742
        %v1912 = vunpack.c.h.b16 %v1742
        %v1913 = vunpack.c.l.b16 %v1743
        %v1914 = vunpack.c.h.b16 %v1743
        %v1915 = vunpack.c.l.b16 %v1744
        %v1916 = vunpack.c.h.b16 %v1744
        %v1917 = vunpack.c.l.b16 %v1745
        %v1918 = vunpack.c.h.b16 %v1745
        %v1919 = vunpack.c.l.b16 %v1746
        %v1920 = vunpack.c.h.b16 %v1746
        %v1921 = vunpack.c.l.b16 %v1747
        %v1922 = vunpack.c.h.b16 %v1747
        %v1923 = vunpack.c.l.b16 %v1748
        %v1924 = vunpack.c.h.b16 %v1748
        %v1925 = vunpack.c.l.b16 %v1749
        %v1926 = vunpack.c.h.b16 %v1749
        %v1927 = vunpack.c.l.b16 %v1750
        %v1928 = vunpack.c.h.b16 %v1750
        %v1929 = vunpack.c.l.b16 %v1751
        %v1930 = vunpack.c.h.b16 %v1751
        %v1931 = vunpack.c.l.b16 %v1752
        %v1932 = vunpack.c.h.b16 %v1752
        %v1933 = vunpack.c.l.b16 %v1753
        %v1934 = vunpack.c.h.b16 %v1753
        %v1935 = vunpack.c.l.b16 %v1754
        %v1936 = vunpack.c.h.b16 %v1754
        %v1937 = vunpack.c.l.b16 %v1755
        %v1938 = vunpack.c.h.b16 %v1755
        %v1939 = vunpack.c.l.b16 %v1756
        %v1940 = vunpack.c.h.b16 %v1756
        %v1941 = vunpack.c.l.b16 %v1757
        %v1942 = vunpack.c.h.b16 %v1757
        %v1943 = vunpack.c.l.b16 %v1758
        %v1944 = vunpack.c.h.b16 %v1758
        %v1945 = vunpack.c.l.b16 %v1759
        %v1946 = vunpack.c.h.b16 %v1759
        %v1947 = vunpack.c.l.b16 %v1760
        %v1948 = vunpack.c.h.b16 %v1760
        %v1949 = vunpack.c.l.b16 %v1761
        %v1950 = vunpack.c.h.b16 %v1761
        %v1951 = vunpack.c.l.b16 %v1762
        %v1952 = vunpack.c.h.b16 %v1762
        %v1953 = vunpack.c.l.b16 %v1763
        %v1954 = vunpack.c.h.b16 %v1763
        %v1955 = vunpack.c.l.b16 %v1764
        %v1956 = vunpack.c.h.b16 %v1764
        %v1957 = vunpack.c.l.b16 %v1765
        %v1958 = vunpack.c.h.b16 %v1765
        %v1959 = vpack.c.b16 %v1833, %v1831
        %v1960 = vpack.c.b16 %v1834, %v1832
        %v1961 = vpack.c.b16 %v1837, %v1835
        %v1962 = vpack.c.b16 %v1838, %v1836
        %v1963 = vpack.c.b16 %v1841, %v1839
        %v1964 = vpack.c.b16 %v1842, %v1840
        %v1965 = vpack.c.b16 %v1845, %v1843
        %v1966 = vpack.c.b16 %v1846, %v1844
        %v1967 = vpack.c.b16 %v1849, %v1847
        %v1968 = vpack.c.b16 %v1850, %v1848
        %v1969 = vpack.c.b16 %v1853, %v1851
        %v1970 = vpack.c.b16 %v1854, %v1852
        %v1971 = vpack.c.b16 %v1857, %v1855
        %v1972 = vpack.c.b16 %v1858, %v1856
        %v1973 = vpack.c.b16 %v1861, %v1859
        %v1974 = vpack.c.b16 %v1862, %v1860
        %v1975 = vpack.c.b16 %v1865, %v1863
        %v1976 = vpack.c.b16 %v1866, %v1864
        %v1977 = vpack.c.b16 %v1869, %v1867
        %v1978 = vpack.c.b16 %v1870, %v1868
        %v1979 = vpack.c.b16 %v1873, %v1871
        %v1980 = vpack.c.b16 %v1874, %v1872
        %v1981 = vpack.c.b16 %v1877, %v1875
        %v1982 = vpack.c.b16 %v1878, %v1876
        %v1983 = vpack.c.b16 %v1881, %v1879
        %v1984 = vpack.c.b16 %v1882, %v1880
        %v1985 = vpack.c.b16 %v1885, %v1883
        %v1986 = vpack.c.b16 %v1886, %v1884
        %v1987 = vpack.c.b16 %v1889, %v1887
        %v1988 = vpack.c.b16 %v1890, %v1888
        %v1989 = vpack.c.b16 %v1893, %v1891
        %v1990 = vpack.c.b16 %v1894, %v1892
        %v1991 = vpack.c.b16 %v1897, %v1895
        %v1992 = vpack.c.b16 %v1898, %v1896
        %v1993 = vpack.c.b16 %v1901, %v1899
        %v1994 = vpack.c.b16 %v1902, %v1900
        %v1995 = vpack.c.b16 %v1905, %v1903
        %v1996 = vpack.c.b16 %v1906, %v1904
        %v1997 = vpack.c.b16 %v1909, %v1907
        %v1998 = vpack.c.b16 %v1910, %v1908
        %v1999 = vpack.c.b16 %v1913, %v1911
        %v2000 = vpack.c.b16 %v1914, %v1912
        %v2001 = vpack.c.b16 %v1917, %v1915
        %v2002 = vpack.c.b16 %v1918, %v1916
        %v2003 = vpack.c.b16 %v1921, %v1919
        %v2004 = vpack.c.b16 %v1922, %v1920
        %v2005 = vpack.c.b16 %v1925, %v1923
        %v2006 = vpack.c.b16 %v1926, %v1924
        %v2007 = vpack.c.b16 %v1929, %v1927
        %v2008 = vpack.c.b16 %v1930, %v1928
        %v2009 = vpack.c.b16 %v1933, %v1931
        %v2010 = vpack.c.b16 %v1934, %v1932
        %v2011 = vpack.c.b16 %v1937, %v1935
        %v2012 = vpack.c.b16 %v1938, %v1936
        %v2013 = vpack.c.b16 %v1941, %v1939
        %v2014 = vpack.c.b16 %v1942, %v1940
        %v2015 = vpack.c.b16 %v1945, %v1943
        %v2016 = vpack.c.b16 %v1946, %v1944
        %v2017 = vpack.c.b16 %v1949, %v1947
        %v2018 = vpack.c.b16 %v1950, %v1948
        %v2019 = vpack.c.b16 %v1953, %v1951
        %v2020 = vpack.c.b16 %v1954, %v1952
        %v2021 = vpack.c.b16 %v1957, %v1955
        %v2022 = vpack.c.b16 %v1958, %v1956
        %v2088 = vlaneseq
        %v2089 = vshrl.u32 %v2088, 7
        %v2090 = vsub.s32 0, %v2089
        %v2091 = vrot.slane %v1766, %v2090
        %v2092 = vlaneseq
        %v2093 = vshrl.u32 %v2092, 7
        %v2094 = vsub.s32 1, %v2093
        %v2095 = vrot.slane %v1766, %v2094
        %2098 = vmatprep.subr.bf16.mxu0 %v1974
        %2099 = vmatpush1.bf16.msra.mxu0 %v1973
        %2100 = vmatprep.subr.bf16.mxu0 %v1972
        %2101 = vmatpush1.bf16.msra.mxu0 %v1971
        %2102 = vmatprep.subr.bf16.mxu0 %v1970
        %2103 = vmatpush1.bf16.msra.mxu0 %v1969
        %2104 = vmatprep.subr.bf16.mxu0 %v1968
        %2105 = vmatpush1.bf16.msra.mxu0 %v1967
        %2106 = vmatprep.subr.bf16.mxu0 %v1966
        %2107 = vmatpush1.bf16.msra.mxu0 %v1965
        %2108 = vmatprep.subr.bf16.mxu0 %v1964
        %2109 = vmatpush1.bf16.msra.mxu0 %v1963
        %2110 = vmatprep.subr.bf16.mxu0 %v1962
        %2111 = vmatpush1.bf16.msra.mxu0 %v1961
        %2112 = vmatprep.subr.bf16.mxu0 %v1960
        %2113 = vmatpush1.bf16.msra.mxu0 %v1959
        %2114 = vmatprep.subr.bf16.mxu0 %v1990
        %2115 = vmatpush2.bf16.msra.mxu0 %v1989
        %2116 = vmatprep.subr.bf16.mxu0 %v1988
        %2117 = vmatpush2.bf16.msra.mxu0 %v1987
        %2118 = vmatprep.subr.bf16.mxu0 %v1986
        %2119 = vmatpush2.bf16.msra.mxu0 %v1985
        %2120 = vmatprep.subr.bf16.mxu0 %v1984
        %2121 = vmatpush2.bf16.msra.mxu0 %v1983
        %2122 = vmatprep.subr.bf16.mxu0 %v1982
        %2123 = vmatpush2.bf16.msra.mxu0 %v1981
        %2124 = vmatprep.subr.bf16.mxu0 %v1980
        %2125 = vmatpush2.bf16.msra.mxu0 %v1979
        %2126 = vmatprep.subr.bf16.mxu0 %v1978
        %2127 = vmatpush2.bf16.msra.mxu0 %v1977
        %2128 = vmatprep.subr.bf16.mxu0 %v1976
        %2129 = vmatpush2.bf16.msra.mxu0 %v1975
        %2130 = vmatprep.mubr.bf16.mxu0 %v1699
        %2131 = vmatmul.mubr.bf16.gmra.mxu0 %v1698
        %v2132 = vpop.f32.mrf.mxu0
        %v2133 = vadd.f32 %v2091, %v2132
        %v2134 = vpop.f32.mrf.mxu0
        %v2135 = vadd.f32 %v2095, %v2134
        %v2136 = vpop.f32.mrf.mxu0
        %v2137 = vpop.f32.mrf.mxu0
        %2138 = vdwg.mxu0
        %2139 = vmatprep.subr.bf16.mxu0 %v2006
        %2140 = vmatpush1.bf16.msra.mxu0 %v2005
        %2141 = vmatprep.subr.bf16.mxu0 %v2004
        %2142 = vmatpush1.bf16.msra.mxu0 %v2003
        %2143 = vmatprep.subr.bf16.mxu0 %v2002
        %2144 = vmatpush1.bf16.msra.mxu0 %v2001
        %2145 = vmatprep.subr.bf16.mxu0 %v2000
        %2146 = vmatpush1.bf16.msra.mxu0 %v1999
        %2147 = vmatprep.subr.bf16.mxu0 %v1998
        %2148 = vmatpush1.bf16.msra.mxu0 %v1997
        %2149 = vmatprep.subr.bf16.mxu0 %v1996
        %2150 = vmatpush1.bf16.msra.mxu0 %v1995
        %2151 = vmatprep.subr.bf16.mxu0 %v1994
        %2152 = vmatpush1.bf16.msra.mxu0 %v1993
        %2153 = vmatprep.subr.bf16.mxu0 %v1992
        %2154 = vmatpush1.bf16.msra.mxu0 %v1991
        %2155 = vmatprep.subr.bf16.mxu0 %v2022
        %2156 = vmatpush2.bf16.msra.mxu0 %v2021
        %2157 = vmatprep.subr.bf16.mxu0 %v2020
        %2158 = vmatpush2.bf16.msra.mxu0 %v2019
        %2159 = vmatprep.subr.bf16.mxu0 %v2018
        %2160 = vmatpush2.bf16.msra.mxu0 %v2017
        %2161 = vmatprep.subr.bf16.mxu0 %v2016
        %2162 = vmatpush2.bf16.msra.mxu0 %v2015
        %2163 = vmatprep.subr.bf16.mxu0 %v2014
        %2164 = vmatpush2.bf16.msra.mxu0 %v2013
        %2165 = vmatprep.subr.bf16.mxu0 %v2012
        %2166 = vmatpush2.bf16.msra.mxu0 %v2011
        %2167 = vmatprep.subr.bf16.mxu0 %v2010
        %2168 = vmatpush2.bf16.msra.mxu0 %v2009
        %2169 = vmatprep.subr.bf16.mxu0 %v2008
        %2170 = vmatpush2.bf16.msra.mxu0 %v2007
        %2171 = vmatprep.mubr.bf16.mxu0 %v1701
        %2172 = vmatmul.mubr.bf16.gmra.mxu0 %v1700
        %v2173 = vpop.f32.mrf.mxu0
        %v2174 = vadd.f32 %v2133, %v2173
        %v2175 = vpop.f32.mrf.mxu0
        %v2176 = vadd.f32 %v2135, %v2175
        %v2177 = vpop.f32.mrf.mxu0
        %v2178 = vpop.f32.mrf.mxu0
        %2179 = vdwg.mxu0
        %v2180 = vmax.f32 %v2174, 0.0
        %v2181 = vmax.f32 %v2176, 0.0
        %v2182 = vpack.c.bf16 %v2180, %v2180
        %v2183 = vpack.c.bf16 %v2181, %v2181
        %v2184 = vld [vmem:[%s8] sm:$0xff]
        %v2185 = vld [vmem:[%s8 + $0x8] sm:$0xff]
        %v2186 = vld [vmem:[%s8 + $0x10] sm:$0xff]
        %v2187 = vld [vmem:[%s8 + $0x18] sm:$0xff]
        %v2188 = vld [vmem:[%s8 + $0x20] sm:$0xff]
        %v2189 = vld [vmem:[%s8 + $0x28] sm:$0xff]
        %v2190 = vld [vmem:[%s8 + $0x30] sm:$0xff]
        %v2191 = vld [vmem:[%s8 + $0x38] sm:$0xff]
        %v2192 = vld [vmem:[%s8 + $0x40] sm:$0xff]
        %v2193 = vld [vmem:[%s8 + $0x48] sm:$0xff]
        %v2194 = vld [vmem:[%s8 + $0x50] sm:$0xff]
        %v2195 = vld [vmem:[%s8 + $0x58] sm:$0xff]
        %v2196 = vld [vmem:[%s8 + $0x60] sm:$0xff]
        %v2197 = vld [vmem:[%s8 + $0x68] sm:$0xff]
        %v2198 = vld [vmem:[%s8 + $0x70] sm:$0xff]
        %v2199 = vld [vmem:[%s8 + $0x78] sm:$0xff]
        %v2200 = vld [vmem:[%s8 + $0x80] sm:$0xff]
        %v2201 = vld [vmem:[%s8 + $0x88] sm:$0xff]
        %v2202 = vld [vmem:[%s8 + $0x90] sm:$0xff]
        %v2203 = vld [vmem:[%s8 + $0x98] sm:$0xff]
        %v2204 = vld [vmem:[%s8 + $0xa0] sm:$0xff]
        %v2205 = vld [vmem:[%s8 + $0xa8] sm:$0xff]
        %v2206 = vld [vmem:[%s8 + $0xb0] sm:$0xff]
        %v2207 = vld [vmem:[%s8 + $0xb8] sm:$0xff]
        %v2208 = vld [vmem:[%s8 + $0xc0] sm:$0xff]
        %v2209 = vld [vmem:[%s8 + $0xc8] sm:$0xff]
        %v2210 = vld [vmem:[%s8 + $0xd0] sm:$0xff]
        %v2211 = vld [vmem:[%s8 + $0xd8] sm:$0xff]
        %v2212 = vld [vmem:[%s8 + $0xe0] sm:$0xff]
        %v2213 = vld [vmem:[%s8 + $0xe8] sm:$0xff]
        %v2214 = vld [vmem:[%s8 + $0xf0] sm:$0xff]
        %v2215 = vld [vmem:[%s8 + $0xf8] sm:$0xff]
        %v2216 = vld [vmem:[%s9] sm:$0x3]
        %v2249 = vunpack.c.l.b16 %v2184
        %v2250 = vunpack.c.h.b16 %v2184
        %v2251 = vunpack.c.l.b16 %v2185
        %v2252 = vunpack.c.h.b16 %v2185
        %v2253 = vunpack.c.l.b16 %v2186
        %v2254 = vunpack.c.h.b16 %v2186
        %v2255 = vunpack.c.l.b16 %v2187
        %v2256 = vunpack.c.h.b16 %v2187
        %v2257 = vunpack.c.l.b16 %v2188
        %v2258 = vunpack.c.h.b16 %v2188
        %v2259 = vunpack.c.l.b16 %v2189
        %v2260 = vunpack.c.h.b16 %v2189
        %v2261 = vunpack.c.l.b16 %v2190
        %v2262 = vunpack.c.h.b16 %v2190
        %v2263 = vunpack.c.l.b16 %v2191
        %v2264 = vunpack.c.h.b16 %v2191
        %v2265 = vunpack.c.l.b16 %v2192
        %v2266 = vunpack.c.h.b16 %v2192
        %v2267 = vunpack.c.l.b16 %v2193
        %v2268 = vunpack.c.h.b16 %v2193
        %v2269 = vunpack.c.l.b16 %v2194
        %v2270 = vunpack.c.h.b16 %v2194
        %v2271 = vunpack.c.l.b16 %v2195
        %v2272 = vunpack.c.h.b16 %v2195
        %v2273 = vunpack.c.l.b16 %v2196
        %v2274 = vunpack.c.h.b16 %v2196
        %v2275 = vunpack.c.l.b16 %v2197
        %v2276 = vunpack.c.h.b16 %v2197
        %v2277 = vunpack.c.l.b16 %v2198
        %v2278 = vunpack.c.h.b16 %v2198
        %v2279 = vunpack.c.l.b16 %v2199
        %v2280 = vunpack.c.h.b16 %v2199
        %v2281 = vunpack.c.l.b16 %v2200
        %v2282 = vunpack.c.h.b16 %v2200
        %v2283 = vunpack.c.l.b16 %v2201
        %v2284 = vunpack.c.h.b16 %v2201
        %v2285 = vunpack.c.l.b16 %v2202
        %v2286 = vunpack.c.h.b16 %v2202
        %v2287 = vunpack.c.l.b16 %v2203
        %v2288 = vunpack.c.h.b16 %v2203
        %v2289 = vunpack.c.l.b16 %v2204
        %v2290 = vunpack.c.h.b16 %v2204
        %v2291 = vunpack.c.l.b16 %v2205
        %v2292 = vunpack.c.h.b16 %v2205
        %v2293 = vunpack.c.l.b16 %v2206
        %v2294 = vunpack.c.h.b16 %v2206
        %v2295 = vunpack.c.l.b16 %v2207
        %v2296 = vunpack.c.h.b16 %v2207
        %v2297 = vunpack.c.l.b16 %v2208
        %v2298 = vunpack.c.h.b16 %v2208
        %v2299 = vunpack.c.l.b16 %v2209
        %v2300 = vunpack.c.h.b16 %v2209
        %v2301 = vunpack.c.l.b16 %v2210
        %v2302 = vunpack.c.h.b16 %v2210
        %v2303 = vunpack.c.l.b16 %v2211
        %v2304 = vunpack.c.h.b16 %v2211
        %v2305 = vunpack.c.l.b16 %v2212
        %v2306 = vunpack.c.h.b16 %v2212
        %v2307 = vunpack.c.l.b16 %v2213
        %v2308 = vunpack.c.h.b16 %v2213
        %v2309 = vunpack.c.l.b16 %v2214
        %v2310 = vunpack.c.h.b16 %v2214
        %v2311 = vunpack.c.l.b16 %v2215
        %v2312 = vunpack.c.h.b16 %v2215
        %v2313 = vpack.c.b16 %v2251, %v2249
        %v2314 = vpack.c.b16 %v2252, %v2250
        %v2315 = vpack.c.b16 %v2255, %v2253
        %v2316 = vpack.c.b16 %v2256, %v2254
        %v2317 = vpack.c.b16 %v2259, %v2257
        %v2318 = vpack.c.b16 %v2260, %v2258
        %v2319 = vpack.c.b16 %v2263, %v2261
        %v2320 = vpack.c.b16 %v2264, %v2262
        %v2321 = vpack.c.b16 %v2267, %v2265
        %v2322 = vpack.c.b16 %v2268, %v2266
        %v2323 = vpack.c.b16 %v2271, %v2269
        %v2324 = vpack.c.b16 %v2272, %v2270
        %v2325 = vpack.c.b16 %v2275, %v2273
        %v2326 = vpack.c.b16 %v2276, %v2274
        %v2327 = vpack.c.b16 %v2279, %v2277
        %v2328 = vpack.c.b16 %v2280, %v2278
        %v2329 = vpack.c.b16 %v2283, %v2281
        %v2330 = vpack.c.b16 %v2284, %v2282
        %v2331 = vpack.c.b16 %v2287, %v2285
        %v2332 = vpack.c.b16 %v2288, %v2286
        %v2333 = vpack.c.b16 %v2291, %v2289
        %v2334 = vpack.c.b16 %v2292, %v2290
        %v2335 = vpack.c.b16 %v2295, %v2293
        %v2336 = vpack.c.b16 %v2296, %v2294
        %v2337 = vpack.c.b16 %v2299, %v2297
        %v2338 = vpack.c.b16 %v2300, %v2298
        %v2339 = vpack.c.b16 %v2303, %v2301
        %v2340 = vpack.c.b16 %v2304, %v2302
        %v2341 = vpack.c.b16 %v2307, %v2305
        %v2342 = vpack.c.b16 %v2308, %v2306
        %v2343 = vpack.c.b16 %v2311, %v2309
        %v2344 = vpack.c.b16 %v2312, %v2310
        %v2378 = vlaneseq
        %v2379 = vshrl.u32 %v2378, 7
        %v2380 = vsub.s32 0, %v2379
        %v2381 = vrot.slane %v2216, %v2380
        %v2382 = vlaneseq
        %v2383 = vshrl.u32 %v2382, 7
        %v2384 = vsub.s32 1, %v2383
        %v2385 = vrot.slane %v2216, %v2384
        %2388 = vmatprep.subr.bf16.mxu0 %v2328
        %2389 = vmatpush1.bf16.msra.mxu0 %v2327
        %2390 = vmatprep.subr.bf16.mxu0 %v2326
        %2391 = vmatpush1.bf16.msra.mxu0 %v2325
        %2392 = vmatprep.subr.bf16.mxu0 %v2324
        %2393 = vmatpush1.bf16.msra.mxu0 %v2323
        %2394 = vmatprep.subr.bf16.mxu0 %v2322
        %2395 = vmatpush1.bf16.msra.mxu0 %v2321
        %2396 = vmatprep.subr.bf16.mxu0 %v2320
        %2397 = vmatpush1.bf16.msra.mxu0 %v2319
        %2398 = vmatprep.subr.bf16.mxu0 %v2318
        %2399 = vmatpush1.bf16.msra.mxu0 %v2317
        %2400 = vmatprep.subr.bf16.mxu0 %v2316
        %2401 = vmatpush1.bf16.msra.mxu0 %v2315
        %2402 = vmatprep.subr.bf16.mxu0 %v2314
        %2403 = vmatpush1.bf16.msra.mxu0 %v2313
        %2404 = vmatprep.subr.bf16.mxu0 %v2344
        %2405 = vmatpush2.bf16.msra.mxu0 %v2343
        %2406 = vmatprep.subr.bf16.mxu0 %v2342
        %2407 = vmatpush2.bf16.msra.mxu0 %v2341
        %2408 = vmatprep.subr.bf16.mxu0 %v2340
        %2409 = vmatpush2.bf16.msra.mxu0 %v2339
        %2410 = vmatprep.subr.bf16.mxu0 %v2338
        %2411 = vmatpush2.bf16.msra.mxu0 %v2337
        %2412 = vmatprep.subr.bf16.mxu0 %v2336
        %2413 = vmatpush2.bf16.msra.mxu0 %v2335
        %2414 = vmatprep.subr.bf16.mxu0 %v2334
        %2415 = vmatpush2.bf16.msra.mxu0 %v2333
        %2416 = vmatprep.subr.bf16.mxu0 %v2332
        %2417 = vmatpush2.bf16.msra.mxu0 %v2331
        %2418 = vmatprep.subr.bf16.mxu0 %v2330
        %2419 = vmatpush2.bf16.msra.mxu0 %v2329
        %2420 = vmatprep.mubr.bf16.mxu0 %v2183
        %2421 = vmatmul.mubr.bf16.gmra.mxu0 %v2182
        %v2422 = vpop.f32.mrf.mxu0
        %v2423 = vadd.f32 %v2381, %v2422
        %v2424 = vpop.f32.mrf.mxu0
        %v2425 = vadd.f32 %v2385, %v2424
        %v2426 = vpop.f32.mrf.mxu0
        %v2427 = vpop.f32.mrf.mxu0
        %2428 = vdwg.mxu0
        %v2429 = vmax.f32 %v2423, 0.0
        %v2430 = vmax.f32 %v2425, 0.0
        %v2431 = vpack.c.bf16 %v2429, %v2429
        %v2432 = vpack.c.bf16 %v2430, %v2430
        %v2433 = vld [vmem:[%s10] sm:$0xf]
        %v2434 = vld [vmem:[%s10 + $0x4] sm:$0xf]
        %v2435 = vld [vmem:[%s10 + $0x8] sm:$0xf]
        %v2436 = vld [vmem:[%s10 + $0xc] sm:$0xf]
        %v2437 = vld [vmem:[%s10 + $0x10] sm:$0xf]
        %v2438 = vld [vmem:[%s10 + $0x14] sm:$0xf]
        %v2439 = vld [vmem:[%s10 + $0x18] sm:$0xf]
        %v2440 = vld [vmem:[%s10 + $0x1c] sm:$0xf]
        %v2441 = vld [vmem:[%s10 + $0x20] sm:$0xf]
        %v2442 = vld [vmem:[%s10 + $0x24] sm:$0xf]
        %v2443 = vld [vmem:[%s10 + $0x28] sm:$0xf]
        %v2444 = vld [vmem:[%s10 + $0x2c] sm:$0xf]
        %v2445 = vld [vmem:[%s10 + $0x30] sm:$0xf]
        %v2446 = vld [vmem:[%s10 + $0x34] sm:$0xf]
        %v2447 = vld [vmem:[%s10 + $0x38] sm:$0xf]
        %v2448 = vld [vmem:[%s10 + $0x3c] sm:$0xf]
        %v2449 = vld [vmem:[%s10 + $0x40] sm:$0xf]
        %v2450 = vld [vmem:[%s10 + $0x44] sm:$0xf]
        %v2451 = vld [vmem:[%s10 + $0x48] sm:$0xf]
        %v2452 = vld [vmem:[%s10 + $0x4c] sm:$0xf]
        %v2453 = vld [vmem:[%s10 + $0x50] sm:$0xf]
        %v2454 = vld [vmem:[%s10 + $0x54] sm:$0xf]
        %v2455 = vld [vmem:[%s10 + $0x58] sm:$0xf]
        %v2456 = vld [vmem:[%s10 + $0x5c] sm:$0xf]
        %v2457 = vld [vmem:[%s10 + $0x60] sm:$0xf]
        %v2458 = vld [vmem:[%s10 + $0x64] sm:$0xf]
        %v2459 = vld [vmem:[%s10 + $0x68] sm:$0xf]
        %v2460 = vld [vmem:[%s10 + $0x6c] sm:$0xf]
        %v2461 = vld [vmem:[%s10 + $0x70] sm:$0xf]
        %v2462 = vld [vmem:[%s10 + $0x74] sm:$0xf]
        %v2463 = vld [vmem:[%s10 + $0x78] sm:$0xf]
        %v2464 = vld [vmem:[%s10 + $0x7c] sm:$0xf]
        %v2465 = vld [vmem:[%s11] sm:$0x1]
        %v2498 = vunpack.c.l.b16 %v2433
        %v2499 = vunpack.c.l.b16 %v2434
        %v2500 = vunpack.c.l.b16 %v2435
        %v2501 = vunpack.c.l.b16 %v2436
        %v2502 = vunpack.c.l.b16 %v2437
        %v2503 = vunpack.c.l.b16 %v2438
        %v2504 = vunpack.c.l.b16 %v2439
        %v2505 = vunpack.c.l.b16 %v2440
        %v2506 = vunpack.c.l.b16 %v2441
        %v2507 = vunpack.c.l.b16 %v2442
        %v2508 = vunpack.c.l.b16 %v2443
        %v2509 = vunpack.c.l.b16 %v2444
        %v2510 = vunpack.c.l.b16 %v2445
        %v2511 = vunpack.c.l.b16 %v2446
        %v2512 = vunpack.c.l.b16 %v2447
        %v2513 = vunpack.c.l.b16 %v2448
        %v2514 = vunpack.c.l.b16 %v2449
        %v2515 = vunpack.c.l.b16 %v2450
        %v2516 = vunpack.c.l.b16 %v2451
        %v2517 = vunpack.c.l.b16 %v2452
        %v2518 = vunpack.c.l.b16 %v2453
        %v2519 = vunpack.c.l.b16 %v2454
        %v2520 = vunpack.c.l.b16 %v2455
        %v2521 = vunpack.c.l.b16 %v2456
        %v2522 = vunpack.c.l.b16 %v2457
        %v2523 = vunpack.c.l.b16 %v2458
        %v2524 = vunpack.c.l.b16 %v2459
        %v2525 = vunpack.c.l.b16 %v2460
        %v2526 = vunpack.c.l.b16 %v2461
        %v2527 = vunpack.c.l.b16 %v2462
        %v2528 = vunpack.c.l.b16 %v2463
        %v2529 = vunpack.c.l.b16 %v2464
        %v2530 = vpack.c.b16 %v2499, %v2498
        %v2531 = vpack.c.b16 %v2501, %v2500
        %v2532 = vpack.c.b16 %v2503, %v2502
        %v2533 = vpack.c.b16 %v2505, %v2504
        %v2534 = vpack.c.b16 %v2507, %v2506
        %v2535 = vpack.c.b16 %v2509, %v2508
        %v2536 = vpack.c.b16 %v2511, %v2510
        %v2537 = vpack.c.b16 %v2513, %v2512
        %v2538 = vpack.c.b16 %v2515, %v2514
        %v2539 = vpack.c.b16 %v2517, %v2516
        %v2540 = vpack.c.b16 %v2519, %v2518
        %v2541 = vpack.c.b16 %v2521, %v2520
        %v2542 = vpack.c.b16 %v2523, %v2522
        %v2543 = vpack.c.b16 %v2525, %v2524
        %v2544 = vpack.c.b16 %v2527, %v2526
        %v2545 = vpack.c.b16 %v2529, %v2528
        %2562 = vmatprep.subr.bf16.mxu0 0
        %2563 = vmatpush1.bf16.msra.mxu0 %v2537
        %2564 = vmatprep.subr.bf16.mxu0 0
        %2565 = vmatpush1.bf16.msra.mxu0 %v2536
        %2566 = vmatprep.subr.bf16.mxu0 0
        %2567 = vmatpush1.bf16.msra.mxu0 %v2535
        %2568 = vmatprep.subr.bf16.mxu0 0
        %2569 = vmatpush1.bf16.msra.mxu0 %v2534
        %2570 = vmatprep.subr.bf16.mxu0 0
        %2571 = vmatpush1.bf16.msra.mxu0 %v2533
        %2572 = vmatprep.subr.bf16.mxu0 0
        %2573 = vmatpush1.bf16.msra.mxu0 %v2532
        %2574 = vmatprep.subr.bf16.mxu0 0
        %2575 = vmatpush1.bf16.msra.mxu0 %v2531
        %2576 = vmatprep.subr.bf16.mxu0 0
        %2577 = vmatpush1.bf16.msra.mxu0 %v2530
        %2578 = vmatprep.subr.bf16.mxu0 0
        %2579 = vmatpush2.bf16.msra.mxu0 %v2545
        %2580 = vmatprep.subr.bf16.mxu0 0
        %2581 = vmatpush2.bf16.msra.mxu0 %v2544
        %2582 = vmatprep.subr.bf16.mxu0 0
        %2583 = vmatpush2.bf16.msra.mxu0 %v2543
        %2584 = vmatprep.subr.bf16.mxu0 0
        %2585 = vmatpush2.bf16.msra.mxu0 %v2542
        %2586 = vmatprep.subr.bf16.mxu0 0
        %2587 = vmatpush2.bf16.msra.mxu0 %v2541
        %2588 = vmatprep.subr.bf16.mxu0 0
        %2589 = vmatpush2.bf16.msra.mxu0 %v2540
        %2590 = vmatprep.subr.bf16.mxu0 0
        %2591 = vmatpush2.bf16.msra.mxu0 %v2539
        %2592 = vmatprep.subr.bf16.mxu0 0
        %2593 = vmatpush2.bf16.msra.mxu0 %v2538
        %2594 = vmatprep.mubr.bf16.mxu0 %v2432
        %2595 = vmatmul.mubr.bf16.gmra.mxu0 %v2431
        %v2596 = vpop.f32.mrf.mxu0
        %v2597 = vadd.f32 %v2465, %v2596
        %v2598 = vpop.f32.mrf.mxu0
        %v2599 = vpop.f32.mrf.mxu0
        %v2600 = vpop.f32.mrf.mxu0
        %2601 = vdwg.mxu0
        %v2602 = vlaneseq
        %v2603 = vand.u32 %v2602, 127
        %vm2604 = vcmp.eq.s32.totalorder %v2603, 1
        %v2605 = vmax.f32 %v2597, 0.0
        %v2606 = vand.u32 2147483647, %v2597
        %v2607 = vsub.f32 0.0, %v2606
        %v2608 = vmul.f32 %v2607, 1.442695
        %v2609 = vpow.pop %v2608
        %v2610 = vadd.f32 %v2609, 1.0
        %v2611 = vlog2.pop %v2610
        %v2612 = vmul.f32 %v2611, 0.6931472
        %v2613 = vadd.f32 %v2605, %v2612
        %v2614 = vsel %vm2604, %v2613, %v2597
        %2615 = vst [vmem:[%s437] sm:$0x1] %v2614
      $region76: #{bone_age_forward.1} parent=67 // pred_fallthru
        _
      %p2616 = scmp.lt.s32.totalorder %s27, 1
      %s2617 = scalar_select %p2616, %s27, 1
      %s2618 = scalar_lea.vmem %s12, %s2617
      // Predicated region
      $region77: #{bone_age_forward.1} parent=67 // pred_check
        %p2619 = pneg %p312
      $region78: #{bone_age_forward.1} parent=67 // pred_check_branch
        %2621 = sbr.rel (%p2619) target = $region80
      $region79: #{bone_age_forward.1} parent=67 // pred_region
        _
      $region80: #{bone_age_forward.1} parent=67 // pred_fallthru
        _
    $region68: #{bone_age_forward.1} parent=5 // pred_fallthru
      _
    %p2622 = scmp.le.s32.totalorder 2, %s18
    // Predicated region
    $region81: #{bone_age_forward.1} parent=5 // pred_check
      %p2623 = pneg %p2622
    $region82: #{bone_age_forward.1} parent=5 // pred_check_branch
      %2625 = sbr.rel (%p2623) target = $region84
    $region83: #{bone_age_forward.1} parent=5 // pred_region
      %s2626 = ssub.s32 %s18, 2
      // Predicated region
      $region85: #{bone_age_forward.1} parent=83 // pred_check
        %p2627 = pneg %p318
      $region86: #{bone_age_forward.1} parent=83 // pred_check_branch
        %2629 = sbr.rel (%p2627) target = $region88
      $region87: #{bone_age_forward.1} parent=83 // pred_region
        %p2630 = scmp.lt.s32.totalorder %s29, 1
        %s2631 = scalar_select %p2630, %s29, 1
        %s2632 = scalar_lea.vmem %s12, %s2631
      $region88: #{bone_age_forward.1} parent=83 // pred_fallthru
        _
    $region84: #{bone_age_forward.1} parent=5 // pred_fallthru
      _
  $region6: #{bone_age_forward.1} parent=0 // loop_footer
    %s22 = sadd.s32 1, %s18
  $region7: #{bone_age_forward.1} parent=0 // loop_footer_branch
    %17 = sbr.rel target = $region3
  $region8: #{bone_age_forward.1} parent=0 // loop_exit
    _

</llo_original>
